<compile_context>
chip_gen: v5e
topology: v5e:2x2
jax: 0.10.0
libtpu: 0.0.40
codegen_flags: <defaults>
</compile_context>

<pallas_src>
import numpy as np

import jax
import jax.numpy as jnp
from jax import lax
from jax.experimental import pallas as pl
from jax.experimental.pallas import tpu as pltpu


# ------------------------------ kernel --------------------------------------
def make_identity_block_kernel(H, W, C, F1, F2, F3):
    assert F3 == C, "filters3 must equal in_planes for the residual add"
    WC, WF1, WF2, WF3 = W * C, W * F1, W * F2, W * F3

    def kernel(x_ref, w1_ref, s_ref, m_ref, w3_ref, b_ref, o_ref):
        x = x_ref[0]                                            # (H, W*C), lane-dense

        # ---- conv1 (1x1) + BN + ReLU: BN scale folded into w1_big ----
        h1 = jnp.dot(x, w1_ref[...], preferred_element_type=jnp.float32)   # (H, W*F1)
        h1 = jnp.maximum(h1 + b_ref[0:1, :WF1], 0.0)

        # ---- conv2 (3x3, pad=1, stride=1) as 3x (row-shift @ banded) matmuls ----
        # s_ref[dy]  : (H, H)      selects rows y+dy-1 (zero outside -> vertical pad)
        # m_ref[dy]  : (W*F1,W*F2) banded block-Toeplitz for the horizontal taps
        acc = jnp.dot(jnp.dot(s_ref[0], h1, preferred_element_type=jnp.float32),
                      m_ref[0], preferred_element_type=jnp.float32)
        for dy in range(1, 3):                                  # static unroll
            shifted = jnp.dot(s_ref[dy], h1, preferred_element_type=jnp.float32)
            acc = acc + jnp.dot(shifted, m_ref[dy],
                                preferred_element_type=jnp.float32)
        h2 = jnp.maximum(acc + b_ref[1:2, :WF2], 0.0)           # (H, W*F2)

        # ---- conv3 (1x1) + BN, residual add, final ReLU ----
        h3 = jnp.dot(h2, w3_ref[...], preferred_element_type=jnp.float32)  # (H, W*F3)
        h3 = h3 + b_ref[2:3, :WF3]
        o_ref[0] = jnp.maximum(h3 + x, 0.0)

    return kernel


def identity_block_pallas(x_nhwc, w1_big, s_mat, m_mat, w3_big, b_pack):
    """x_nhwc: (N,H,W,C) f32.  w1_big:(W*C,W*F1)  s_mat:(3,H,H)
    m_mat:(3,W*F1,W*F2)  w3_big:(W*F2,W*F3)  b_pack:(3, >=W*max(F1,F2))."""
    N, H, W, C = x_nhwc.shape
    F1 = w1_big.shape[1] // W
    F2 = m_mat.shape[2] // W
    F3 = w3_big.shape[1] // W

    x2 = x_nhwc.reshape(N, H, W * C)          # wrapper-side reshape: (16,128) tiles

    kernel = make_identity_block_kernel(H, W, C, F1, F2, F3)

    out2 = pl.pallas_call(
        kernel,
        out_shape=jax.ShapeDtypeStruct((N, H, W * F3), jnp.float32),
        grid=(N,),
        in_specs=[
            pl.BlockSpec((1, H, W * C), lambda n: (n, 0, 0)),   # x (lane-dense)
            pl.BlockSpec(w1_big.shape, lambda n: (0, 0)),       # conv1 block-diag
            pl.BlockSpec(s_mat.shape, lambda n: (0, 0, 0)),     # 3x row-shift mats
            pl.BlockSpec(m_mat.shape, lambda n: (0, 0, 0)),     # 3x banded mats
            pl.BlockSpec(w3_big.shape, lambda n: (0, 0)),       # conv3 block-diag
            pl.BlockSpec(b_pack.shape, lambda n: (0, 0)),       # packed biases
        ],
        out_specs=pl.BlockSpec((1, H, W * F3), lambda n: (n, 0, 0)),
        compiler_params=pltpu.CompilerParams(
            dimension_semantics=("parallel",)),                 # megacore split on v7x
    )(x2, w1_big, s_mat, m_mat, w3_big, b_pack)

    return out2.reshape(N, H, W, F3)


# --------------------- host-side parameter preparation ----------------------
def build_matmul_params(H, W, w1, w2_full, w3, s1, b1, s2, b2, s3, b3):
    """Fold eval-mode BN scales into the conv weights and build the lane-dense
    matmul operators used by the kernel."""
    w1 = np.asarray(w1, np.float32)          # (C, F1)
    w2 = np.asarray(w2_full, np.float32)     # (3, 3, F1, F2)  HWIO
    w3 = np.asarray(w3, np.float32)          # (F2, F3)
    s1 = np.asarray(s1, np.float32).reshape(-1)
    b1 = np.asarray(b1, np.float32).reshape(-1)
    s2 = np.asarray(s2, np.float32).reshape(-1)
    b2 = np.asarray(b2, np.float32).reshape(-1)
    s3 = np.asarray(s3, np.float32).reshape(-1)
    b3 = np.asarray(b3, np.float32).reshape(-1)

    C, F1 = w1.shape
    F2, F3 = w3.shape
    eye_w = np.eye(W, dtype=np.float32)

    # conv1: block-diagonal (W*C, W*F1), BN scale folded in.
    w1s = w1 * s1[None, :]
    w1_big = np.einsum("xz,cf->xczf", eye_w, w1s).reshape(W * C, W * F1)

    # conv2: row-shift matrices (vertical taps + zero pad in y) ...
    s_mat = np.zeros((3, H, H), np.float32)
    for dy in range(3):
        for y in range(H):
            ysrc = y + dy - 1
            if 0 <= ysrc < H:
                s_mat[dy, y, ysrc] = 1.0
    # ... and banded block-Toeplitz matrices (horizontal taps + zero pad in x),
    # BN scale folded in.
    w2s = w2 * s2[None, None, None, :]
    m_mat = np.zeros((3, W, F1, W, F2), np.float32)
    for dy in range(3):
        for x in range(W):
            for dx in range(3):
                xsrc = x + dx - 1
                if 0 <= xsrc < W:
                    m_mat[dy, xsrc, :, x, :] = w2s[dy, dx]
    m_mat = m_mat.reshape(3, W * F1, W * F2)

    # conv3: block-diagonal (W*F2, W*F3), BN scale folded in.
    w3s = w3 * s3[None, :]
    w3_big = np.einsum("xz,cf->xczf", eye_w, w3s).reshape(W * F2, W * F3)

    # Biases tiled per pixel and packed into one array (single small DMA).
    width = W * max(F1, F2, F3)
    b_pack = np.zeros((3, width), np.float32)
    b_pack[0, :W * F1] = np.tile(b1, W)
    b_pack[1, :W * F2] = np.tile(b2, W)
    b_pack[2, :W * F3] = np.tile(b3, W)

    return (jnp.asarray(w1_big), jnp.asarray(s_mat), jnp.asarray(m_mat),
            jnp.asarray(w3_big), jnp.asarray(b_pack))


# ------------------------- pure-JAX reference ------------------------------
def _conv_nhwc(x, w_hwio, pad):
    return lax.conv_general_dilated(
        x, w_hwio, window_strides=(1, 1),
        padding=[(pad, pad), (pad, pad)],
        dimension_numbers=("NHWC", "HWIO", "NHWC"))


def identity_block_ref(x, w1, w2_full, w3, s1, b1, s2, b2, s3, b3):
    C, F1 = w1.shape
    F2, F3 = w3.shape
    out = _conv_nhwc(x, w1.reshape(1, 1, C, F1), 0)
    out = jax.nn.relu(out * s1 + b1)
    out = _conv_nhwc(out, w2_full, 1)
    out = jax.nn.relu(out * s2 + b2)
    out = _conv_nhwc(out, w3.reshape(1, 1, F2, F3), 0)
    out = out * s3 + b3
    out = out + x
    return jax.nn.relu(out)


# ------------------------- parameter setup ---------------------------------
def make_bn_params(key, f, eps=1e-5):
    k1, k2, k3, k4 = jax.random.split(key, 4)
    gamma = 1.0 + 0.1 * jax.random.normal(k1, (f,), jnp.float32)
    beta = 0.1 * jax.random.normal(k2, (f,), jnp.float32)
    running_mean = 0.1 * jax.random.normal(k3, (f,), jnp.float32)
    running_var = jax.random.uniform(k4, (f,), jnp.float32, 0.5, 1.5)
    scale = gamma / jnp.sqrt(running_var + eps)
    bias = beta - running_mean * scale
    return scale.reshape(1, f), bias.reshape(1, f)


if __name__ == "__main__":
    # Module config: IdentityBlock(in_planes=8, filters=[16, 16, 8], kernel_size=3)
    N, H, W, C = 2, 16, 16, 8
    F1, F2, F3 = 16, 16, 8
    assert F3 == C

    key = jax.random.PRNGKey(0)
    kx, kw1, kw2, kw3, kb1, kb2, kb3 = jax.random.split(key, 7)

    x = jax.random.normal(kx, (N, H, W, C), jnp.float32)

    w1 = 0.2 * jax.random.normal(kw1, (C, F1), jnp.float32)              # conv1 (1x1)
    w2_full = 0.1 * jax.random.normal(kw2, (3, 3, F1, F2), jnp.float32)  # conv2 (3x3, HWIO)
    w3 = 0.2 * jax.random.normal(kw3, (F2, F3), jnp.float32)             # conv3 (1x1)

    s1, b1 = make_bn_params(kb1, F1)
    s2, b2 = make_bn_params(kb2, F2)
    s3, b3 = make_bn_params(kb3, F3)

    w1_big, s_mat, m_mat, w3_big, b_pack = build_matmul_params(
        H, W, w1, w2_full, w3, s1, b1, s2, b2, s3, b3)

    out = identity_block_pallas(x, w1_big, s_mat, m_mat, w3_big, b_pack)
    out = jax.block_until_ready(out)

    ref = identity_block_ref(x, w1, w2_full, w3, s1, b1, s2, b2, s3, b3)
    ref = jax.block_until_ready(ref)

    assert out.shape == (N, H, W, F3)
    assert jnp.allclose(out, ref, rtol=1e-4, atol=2e-4), (
        f"max abs diff = {jnp.max(jnp.abs(out - ref))}")

    print("KERNEL_OK")
</pallas_src>

<mosaic_0001>
module attributes {stable_mosaic.version = 11 : i64} {
  func.func @kernel(%arg0: i32, %arg1: memref<1x16x128xf32, #tpu.memory_space<vmem>>, %arg2: memref<128x256xf32, #tpu.memory_space<vmem>>, %arg3: memref<3x16x16xf32, #tpu.memory_space<vmem>>, %arg4: memref<3x256x256xf32, #tpu.memory_space<vmem>>, %arg5: memref<256x128xf32, #tpu.memory_space<vmem>>, %arg6: memref<3x256xf32, #tpu.memory_space<vmem>>, %arg7: memref<1x16x128xf32, #tpu.memory_space<vmem>>) attributes {dimension_semantics = [#tpu.dimension_semantics<parallel>], iteration_bounds = array<i64: 2>, scalar_prefetch = 0 : i64, scratch_operands = 0 : i64, tpu.core_type = #tpu.core_type<tc>, window_params = [{transform_indices = @transform_0, window_bounds = array<i64: 1, 16, 128>}, {pipeline_mode = #tpu.pipeline_mode<synchronous>, transform_indices = @transform_1, window_bounds = array<i64: 128, 256>}, {pipeline_mode = #tpu.pipeline_mode<synchronous>, transform_indices = @transform_2, window_bounds = array<i64: 3, 16, 16>}, {pipeline_mode = #tpu.pipeline_mode<synchronous>, transform_indices = @transform_3, window_bounds = array<i64: 3, 256, 256>}, {pipeline_mode = #tpu.pipeline_mode<synchronous>, transform_indices = @transform_4, window_bounds = array<i64: 256, 128>}, {pipeline_mode = #tpu.pipeline_mode<synchronous>, transform_indices = @transform_5, window_bounds = array<i64: 3, 256>}, {transform_indices = @transform_6, window_bounds = array<i64: 1, 16, 128>}]} {
    %c0 = arith.constant 0 : index
    %c0_0 = arith.constant 0 : index
    %c0_1 = arith.constant 0 : index
    %0 = vector.load %arg1[%c0, %c0_0, %c0_1] : memref<1x16x128xf32, #tpu.memory_space<vmem>>, vector<1x16x128xf32>
    %1 = vector.shape_cast %0 : vector<1x16x128xf32> to vector<16x128xf32>
    %c0_2 = arith.constant 0 : index
    %c0_3 = arith.constant 0 : index
    %2 = vector.load %arg2[%c0_2, %c0_3] : memref<128x256xf32, #tpu.memory_space<vmem>>, vector<128x256xf32>
    %cst = arith.constant dense<0.000000e+00> : vector<16x256xf32>
    %3 = tpu.matmul %1, %2, %cst {dimension_numbers = #tpu.dot_dimension_numbers<[1], [0], [0], [1], [0, 0, 1, 1], [], []>} : vector<16x128xf32>, vector<128x256xf32>, vector<16x256xf32> -> vector<16x256xf32>
    %c0_4 = arith.constant 0 : index
    %c0_5 = arith.constant 0 : index
    %4 = vector.load %arg6[%c0_4, %c0_5] : memref<3x256xf32, #tpu.memory_space<vmem>>, vector<1x256xf32>
    %5 = vector.broadcast %4 : vector<1x256xf32> to vector<16x256xf32>
    %6 = arith.addf %3, %5 : vector<16x256xf32>
    %cst_6 = arith.constant 0.000000e+00 : f32
    %7 = vector.broadcast %cst_6 : f32 to vector<16x256xf32>
    %8 = arith.maximumf %6, %7 : vector<16x256xf32>
    %c0_7 = arith.constant 0 : index
    %c0_8 = arith.constant 0 : index
    %c0_9 = arith.constant 0 : index
    %9 = vector.load %arg3[%c0_7, %c0_8, %c0_9] : memref<3x16x16xf32, #tpu.memory_space<vmem>>, vector<1x16x16xf32>
    %10 = vector.shape_cast %9 : vector<1x16x16xf32> to vector<16x16xf32>
    %cst_10 = arith.constant dense<0.000000e+00> : vector<16x256xf32>
    %11 = tpu.matmul %10, %8, %cst_10 {dimension_numbers = #tpu.dot_dimension_numbers<[1], [0], [0], [1], [0, 0, 1, 1], [], []>} : vector<16x16xf32>, vector<16x256xf32>, vector<16x256xf32> -> vector<16x256xf32>
    %c0_11 = arith.constant 0 : index
    %c0_12 = arith.constant 0 : index
    %c0_13 = arith.constant 0 : index
    %12 = vector.load %arg4[%c0_11, %c0_12, %c0_13] : memref<3x256x256xf32, #tpu.memory_space<vmem>>, vector<1x256x256xf32>
    %13 = vector.shape_cast %12 : vector<1x256x256xf32> to vector<256x256xf32>
    %cst_14 = arith.constant dense<0.000000e+00> : vector<16x256xf32>
    %14 = tpu.matmul %11, %13, %cst_14 {dimension_numbers = #tpu.dot_dimension_numbers<[1], [0], [0], [1], [0, 0, 1, 1], [], []>} : vector<16x256xf32>, vector<256x256xf32>, vector<16x256xf32> -> vector<16x256xf32>
    %c1 = arith.constant 1 : index
    %c0_15 = arith.constant 0 : index
    %c0_16 = arith.constant 0 : index
    %15 = vector.load %arg3[%c1, %c0_15, %c0_16] : memref<3x16x16xf32, #tpu.memory_space<vmem>>, vector<1x16x16xf32>
    %16 = vector.shape_cast %15 : vector<1x16x16xf32> to vector<16x16xf32>
    %cst_17 = arith.constant dense<0.000000e+00> : vector<16x256xf32>
    %17 = tpu.matmul %16, %8, %cst_17 {dimension_numbers = #tpu.dot_dimension_numbers<[1], [0], [0], [1], [0, 0, 1, 1], [], []>} : vector<16x16xf32>, vector<16x256xf32>, vector<16x256xf32> -> vector<16x256xf32>
    %c1_18 = arith.constant 1 : index
    %c0_19 = arith.constant 0 : index
    %c0_20 = arith.constant 0 : index
    %18 = vector.load %arg4[%c1_18, %c0_19, %c0_20] : memref<3x256x256xf32, #tpu.memory_space<vmem>>, vector<1x256x256xf32>
    %19 = vector.shape_cast %18 : vector<1x256x256xf32> to vector<256x256xf32>
    %cst_21 = arith.constant dense<0.000000e+00> : vector<16x256xf32>
    %20 = tpu.matmul %17, %19, %cst_21 {dimension_numbers = #tpu.dot_dimension_numbers<[1], [0], [0], [1], [0, 0, 1, 1], [], []>} : vector<16x256xf32>, vector<256x256xf32>, vector<16x256xf32> -> vector<16x256xf32>
    %21 = arith.addf %14, %20 : vector<16x256xf32>
    %c2 = arith.constant 2 : index
    %c0_22 = arith.constant 0 : index
    %c0_23 = arith.constant 0 : index
    %22 = vector.load %arg3[%c2, %c0_22, %c0_23] : memref<3x16x16xf32, #tpu.memory_space<vmem>>, vector<1x16x16xf32>
    %23 = vector.shape_cast %22 : vector<1x16x16xf32> to vector<16x16xf32>
    %cst_24 = arith.constant dense<0.000000e+00> : vector<16x256xf32>
    %24 = tpu.matmul %23, %8, %cst_24 {dimension_numbers = #tpu.dot_dimension_numbers<[1], [0], [0], [1], [0, 0, 1, 1], [], []>} : vector<16x16xf32>, vector<16x256xf32>, vector<16x256xf32> -> vector<16x256xf32>
    %c2_25 = arith.constant 2 : index
    %c0_26 = arith.constant 0 : index
    %c0_27 = arith.constant 0 : index
    %25 = vector.load %arg4[%c2_25, %c0_26, %c0_27] : memref<3x256x256xf32, #tpu.memory_space<vmem>>, vector<1x256x256xf32>
    %26 = vector.shape_cast %25 : vector<1x256x256xf32> to vector<256x256xf32>
    %cst_28 = arith.constant dense<0.000000e+00> : vector<16x256xf32>
    %27 = tpu.matmul %24, %26, %cst_28 {dimension_numbers = #tpu.dot_dimension_numbers<[1], [0], [0], [1], [0, 0, 1, 1], [], []>} : vector<16x256xf32>, vector<256x256xf32>, vector<16x256xf32> -> vector<16x256xf32>
    %28 = arith.addf %21, %27 : vector<16x256xf32>
    %c1_29 = arith.constant 1 : index
    %c0_30 = arith.constant 0 : index
    %29 = vector.load %arg6[%c1_29, %c0_30] : memref<3x256xf32, #tpu.memory_space<vmem>>, vector<1x256xf32>
    %30 = vector.broadcast %29 : vector<1x256xf32> to vector<16x256xf32>
    %31 = arith.addf %28, %30 : vector<16x256xf32>
    %cst_31 = arith.constant 0.000000e+00 : f32
    %32 = vector.broadcast %cst_31 : f32 to vector<16x256xf32>
    %33 = arith.maximumf %31, %32 : vector<16x256xf32>
    %c0_32 = arith.constant 0 : index
    %c0_33 = arith.constant 0 : index
    %34 = vector.load %arg5[%c0_32, %c0_33] : memref<256x128xf32, #tpu.memory_space<vmem>>, vector<256x128xf32>
    %cst_34 = arith.constant dense<0.000000e+00> : vector<16x128xf32>
    %35 = tpu.matmul %33, %34, %cst_34 {dimension_numbers = #tpu.dot_dimension_numbers<[1], [0], [0], [1], [0, 0, 1, 1], [], []>} : vector<16x256xf32>, vector<256x128xf32>, vector<16x128xf32> -> vector<16x128xf32>
    %c2_35 = arith.constant 2 : index
    %c0_36 = arith.constant 0 : index
    %36 = vector.load %arg6[%c2_35, %c0_36] : memref<3x256xf32, #tpu.memory_space<vmem>>, vector<1x128xf32>
    %37 = vector.broadcast %36 : vector<1x128xf32> to vector<16x128xf32>
    %38 = arith.addf %35, %37 : vector<16x128xf32>
    %39 = arith.addf %38, %1 : vector<16x128xf32>
    %cst_37 = arith.constant 0.000000e+00 : f32
    %40 = vector.broadcast %cst_37 : f32 to vector<16x128xf32>
    %41 = arith.maximumf %39, %40 : vector<16x128xf32>
    %c0_38 = arith.constant 0 : index
    %c0_39 = arith.constant 0 : index
    %c0_40 = arith.constant 0 : index
    %42 = vector.load %arg7[%c0_38, %c0_39, %c0_40] : memref<1x16x128xf32, #tpu.memory_space<vmem>>, vector<1x16x128xf32>
    %43 = vector.shape_cast %42 : vector<1x16x128xf32> to vector<16x128xf32>
    %44 = vector.shape_cast %41 : vector<16x128xf32> to vector<1x16x128xf32>
    tpu.vector_store %arg7[%c0_38, %c0_39, %c0_40], %44 {strides = array<i32>} : memref<1x16x128xf32, #tpu.memory_space<vmem>>, vector<1x16x128xf32>,
    return
  }
  func.func @transform_0(%arg0: i32) -> (i32, i32, i32) {
    %c0_i32 = arith.constant 0 : i32
    %c0_i32_0 = arith.constant 0 : i32
    %c0_i32_1 = arith.constant 0 : i32
    return %arg0, %c0_i32, %c0_i32_0 : i32, i32, i32
  }
  func.func @transform_1(%arg0: i32) -> (i32, i32) {
    %c0_i32 = arith.constant 0 : i32
    %c0_i32_0 = arith.constant 0 : i32
    %c0_i32_1 = arith.constant 0 : i32
    return %c0_i32, %c0_i32_0 : i32, i32
  }
  func.func @transform_2(%arg0: i32) -> (i32, i32, i32) {
    %c0_i32 = arith.constant 0 : i32
    %c0_i32_0 = arith.constant 0 : i32
    %c0_i32_1 = arith.constant 0 : i32
    %c0_i32_2 = arith.constant 0 : i32
    return %c0_i32, %c0_i32_0, %c0_i32_1 : i32, i32, i32
  }
  func.func @transform_3(%arg0: i32) -> (i32, i32, i32) {
    %c0_i32 = arith.constant 0 : i32
    %c0_i32_0 = arith.constant 0 : i32
    %c0_i32_1 = arith.constant 0 : i32
    %c0_i32_2 = arith.constant 0 : i32
    return %c0_i32, %c0_i32_0, %c0_i32_1 : i32, i32, i32
  }
  func.func @transform_4(%arg0: i32) -> (i32, i32) {
    %c0_i32 = arith.constant 0 : i32
    %c0_i32_0 = arith.constant 0 : i32
    %c0_i32_1 = arith.constant 0 : i32
    return %c0_i32, %c0_i32_0 : i32, i32
  }
  func.func @transform_5(%arg0: i32) -> (i32, i32) {
    %c0_i32 = arith.constant 0 : i32
    %c0_i32_0 = arith.constant 0 : i32
    %c0_i32_1 = arith.constant 0 : i32
    return %c0_i32, %c0_i32_0 : i32, i32
  }
  func.func @transform_6(%arg0: i32) -> (i32, i32, i32) {
    %c0_i32 = arith.constant 0 : i32
    %c0_i32_0 = arith.constant 0 : i32
    %c0_i32_1 = arith.constant 0 : i32
    return %arg0, %c0_i32, %c0_i32_0 : i32, i32, i32
  }
}

</mosaic_0001>

<llo_original>
// kernel: tpu_custom_call.1
$region0: #{tpu_custom_call.1}
  #allocation0 [shape = 'u32[]', space=smem, size = 0x4, offset = 0x4, fixed_abs, tag = 'smem constant byte address 0x4 - core index']
  #allocation1 [shape = 'u32[72,128]{1,0:T(1,128)}', space=vmem, size = 0x9000, scoped, tag = 'internal scratch']
  %s0 = inlined_call_operand.hbm [shape: f32[2,16,128], index: 0, kind: input, shape index: {}]
  %s1 = inlined_call_operand.hbm [shape: f32[128,256], index: 1, kind: input, shape index: {}]
  %s2 = inlined_call_operand.hbm [shape: f32[3,16,16], index: 2, kind: input, shape index: {}]
  %s3 = inlined_call_operand.hbm [shape: f32[3,256,256], index: 3, kind: input, shape index: {}]
  %s4 = inlined_call_operand.hbm [shape: f32[256,128], index: 4, kind: input, shape index: {}]
  %s5 = inlined_call_operand.hbm [shape: f32[3,256], index: 5, kind: input, shape index: {}]
  %s6 = inlined_call_operand.hbm [shape: f32[2,16,128], index: 6, kind: output, shape index: {}]
  %s7 = sld [smem:[#allocation0]]
  $region81: #{tpu_custom_call.1} parent=0
    _
  %s9 = ssub.s32 1, %s7
  %s10 = scalar_select 0, %s9, %s7
  $region1: #{tpu_custom_call.1} parent=0
    #allocation2 [shape = 'u8[16384]{0}', space=vmem, size = 0x4000, scoped, tag = 'input window, operand 0']
    #allocation3 [shape = 's32[2]{0}', space=sflag, size = 0x8, scoped, tag = 'scoped memory for tpu_custom_call.1']
    #allocation4 [shape = 's32[2]{0}', space=sflag, size = 0x8, scoped, tag = 'scoped memory for tpu_custom_call.1']
    #allocation5 [shape = 'u8[131072]{0}', space=vmem, size = 0x20000, scoped, tag = 'input window, operand 1, single buffered']
    #allocation6 [shape = 's32[1]{0}', space=sflag, size = 0x4, scoped, tag = 'scoped memory for tpu_custom_call.1']
    #allocation7 [shape = 'u8[24576]{0}', space=vmem, size = 0x6000, scoped, tag = 'input window, operand 2, single buffered']
    #allocation8 [shape = 'u8[786432]{0}', space=vmem, size = 0xc0000, scoped, tag = 'input window, operand 3, single buffered']
    #allocation9 [shape = 's32[1]{0}', space=sflag, size = 0x4, scoped, tag = 'scoped memory for tpu_custom_call.1']
    #allocation10 [shape = 'u8[131072]{0}', space=vmem, size = 0x20000, scoped, tag = 'input window, operand 4, single buffered']
    #allocation11 [shape = 'u8[4096]{0}', space=vmem, size = 0x1000, scoped, tag = 'input window, operand 5, single buffered']
    #allocation12 [shape = 's32[1]{0}', space=sflag, size = 0x4, scoped, tag = 'scoped memory for tpu_custom_call.1']
    #allocation13 [shape = 'u8[16384]{0}', space=vmem, size = 0x4000, scoped, tag = 'output window, operand 0']
    %11 = vsyncpa [#allocation3], 0
    %s12 = scalar_lea.sflag [#allocation3], 1
    %13 = vsyncpa %s12, 0
    %14 = vsyncpa [#allocation6], 0
    %15 = vsyncpa [#allocation9], 0
    %16 = vsyncpa [#allocation12], 0
    %17 = vsyncpa [#allocation4], 0
    %s18 = scalar_lea.sflag [#allocation4], 1
    %19 = vsyncpa %s18, 0
    loop: start=0, step=1, limit=4
    $region2: #{tpu_custom_call.1} parent=1 // loop_pre_header
      _
    $region3: #{tpu_custom_call.1} parent=1 // loop_header
      %s21 = sphi 0, %s25
      %p22 = scmp.ge.s32.totalorder %s21, 4
      %s31 = sphi 0, %s33
      %s34 = sphi 0, %s31
      %s35 = sphi 0, %s34
      %s51 = sphi 0, %s35
      %s55 = sphi 0, %s55
      %s57 = sphi 0, %s55
      %s58 = sphi 0, %s57
      %s72 = sphi 0, %s58
      %s76 = sphi 0, %s76
      %s78 = sphi 0, %s76
      %s79 = sphi 0, %s78
      %s93 = sphi 0, %s79
      %s97 = sphi 0, %s97
      %s99 = sphi 0, %s97
      %s100 = sphi 0, %s99
      %s114 = sphi 0, %s100
      %s118 = sphi 0, %s118
      %s120 = sphi 0, %s118
      %s121 = sphi 0, %s120
      %s135 = sphi 0, %s121
      %s139 = sphi 0, %s139
      %s141 = sphi 0, %s139
      %s142 = sphi 0, %s141
      %s156 = sphi 0, %s142
      %s162 = sphi 0, %s164
      %s165 = sphi 0, %s162
      %s166 = sphi 0, %s165
      %s182 = sphi 0, %s166
    $region4: #{tpu_custom_call.1} parent=1 // loop_header_branch
      %24 = sbr.rel (%p22) target = $region8
    $region5: #{tpu_custom_call.1} parent=1 // loop_body
      %s26 = ssub.s32 %s21, 1
      %s27 = ssub.s32 %s21, 2
      %s28 = sadd.s32 %s21, 1
      %s29 = ssub.s32 %s21, %s28
      %p30 = scmp.eq.s32.totalorder %s29, 0
      %s32 = sadd.s32 %s31, 1
      %s33 = scalar_select %p30, %s31, %s32
      %p36 = pneg %p30
      %p37 = scmp.eq.s32.totalorder %s21, 1
      %p38 = por %p36, %p37
      %p39 = scmp.ne.s32.totalorder %s31, %s34
      %p40 = scmp.eq.s32.totalorder %s21, 0
      %p41 = por %p39, %p40
      %p42 = scmp.ne.s32.totalorder %s31, %s34
      %p43 = scmp.eq.s32.totalorder %s26, 1
      %p44 = por %p42, %p43
      %p45 = scmp.ne.s32.totalorder %s34, %s35
      %p46 = scmp.eq.s32.totalorder %s26, 0
      %p47 = por %p45, %p46
      %p48 = scmp.ne.s32.totalorder %s34, %s35
      %p49 = scmp.eq.s32.totalorder %s27, 1
      %p50 = por %p48, %p49
      %p52 = scmp.ne.s32.totalorder %s35, %s51
      %p53 = scmp.eq.s32.totalorder %s27, 0
      %p54 = por %p52, %p53
      %s56 = sadd.s32 %s55, 1
      %p59 = scmp.eq.s32.totalorder %s21, 1
      %p60 = scmp.ne.s32.totalorder %s55, %s57
      %p61 = scmp.eq.s32.totalorder %s21, 0
      %p62 = por %p60, %p61
      %p63 = scmp.ne.s32.totalorder %s55, %s57
      %p64 = scmp.eq.s32.totalorder %s26, 1
      %p65 = por %p63, %p64
      %p66 = scmp.ne.s32.totalorder %s57, %s58
      %p67 = scmp.eq.s32.totalorder %s26, 0
      %p68 = por %p66, %p67
      %p69 = scmp.ne.s32.totalorder %s57, %s58
      %p70 = scmp.eq.s32.totalorder %s27, 1
      %p71 = por %p69, %p70
      %p73 = scmp.ne.s32.totalorder %s58, %s72
      %p74 = scmp.eq.s32.totalorder %s27, 0
      %p75 = por %p73, %p74
      %s77 = sadd.s32 %s76, 1
      %p80 = scmp.eq.s32.totalorder %s21, 1
      %p81 = scmp.ne.s32.totalorder %s76, %s78
      %p82 = scmp.eq.s32.totalorder %s21, 0
      %p83 = por %p81, %p82
      %p84 = scmp.ne.s32.totalorder %s76, %s78
      %p85 = scmp.eq.s32.totalorder %s26, 1
      %p86 = por %p84, %p85
      %p87 = scmp.ne.s32.totalorder %s78, %s79
      %p88 = scmp.eq.s32.totalorder %s26, 0
      %p89 = por %p87, %p88
      %p90 = scmp.ne.s32.totalorder %s78, %s79
      %p91 = scmp.eq.s32.totalorder %s27, 1
      %p92 = por %p90, %p91
      %p94 = scmp.ne.s32.totalorder %s79, %s93
      %p95 = scmp.eq.s32.totalorder %s27, 0
      %p96 = por %p94, %p95
      %s98 = sadd.s32 %s97, 1
      %p101 = scmp.eq.s32.totalorder %s21, 1
      %p102 = scmp.ne.s32.totalorder %s97, %s99
      %p103 = scmp.eq.s32.totalorder %s21, 0
      %p104 = por %p102, %p103
      %p105 = scmp.ne.s32.totalorder %s97, %s99
      %p106 = scmp.eq.s32.totalorder %s26, 1
      %p107 = por %p105, %p106
      %p108 = scmp.ne.s32.totalorder %s99, %s100
      %p109 = scmp.eq.s32.totalorder %s26, 0
      %p110 = por %p108, %p109
      %p111 = scmp.ne.s32.totalorder %s99, %s100
      %p112 = scmp.eq.s32.totalorder %s27, 1
      %p113 = por %p111, %p112
      %p115 = scmp.ne.s32.totalorder %s100, %s114
      %p116 = scmp.eq.s32.totalorder %s27, 0
      %p117 = por %p115, %p116
      %s119 = sadd.s32 %s118, 1
      %p122 = scmp.eq.s32.totalorder %s21, 1
      %p123 = scmp.ne.s32.totalorder %s118, %s120
      %p124 = scmp.eq.s32.totalorder %s21, 0
      %p125 = por %p123, %p124
      %p126 = scmp.ne.s32.totalorder %s118, %s120
      %p127 = scmp.eq.s32.totalorder %s26, 1
      %p128 = por %p126, %p127
      %p129 = scmp.ne.s32.totalorder %s120, %s121
      %p130 = scmp.eq.s32.totalorder %s26, 0
      %p131 = por %p129, %p130
      %p132 = scmp.ne.s32.totalorder %s120, %s121
      %p133 = scmp.eq.s32.totalorder %s27, 1
      %p134 = por %p132, %p133
      %p136 = scmp.ne.s32.totalorder %s121, %s135
      %p137 = scmp.eq.s32.totalorder %s27, 0
      %p138 = por %p136, %p137
      %s140 = sadd.s32 %s139, 1
      %p143 = scmp.eq.s32.totalorder %s21, 1
      %p144 = scmp.ne.s32.totalorder %s139, %s141
      %p145 = scmp.eq.s32.totalorder %s21, 0
      %p146 = por %p144, %p145
      %p147 = scmp.ne.s32.totalorder %s139, %s141
      %p148 = scmp.eq.s32.totalorder %s26, 1
      %p149 = por %p147, %p148
      %p150 = scmp.ne.s32.totalorder %s141, %s142
      %p151 = scmp.eq.s32.totalorder %s26, 0
      %p152 = por %p150, %p151
      %p153 = scmp.ne.s32.totalorder %s141, %s142
      %p154 = scmp.eq.s32.totalorder %s27, 1
      %p155 = por %p153, %p154
      %p157 = scmp.ne.s32.totalorder %s142, %s156
      %p158 = scmp.eq.s32.totalorder %s27, 0
      %p159 = por %p157, %p158
      %s160 = ssub.s32 %s21, %s28
      %p161 = scmp.eq.s32.totalorder %s160, 0
      %s163 = sadd.s32 %s162, 1
      %s164 = scalar_select %p161, %s162, %s163
      %p167 = pneg %p161
      %p168 = scmp.eq.s32.totalorder %s21, 1
      %p169 = por %p167, %p168
      %p170 = scmp.ne.s32.totalorder %s162, %s165
      %p171 = scmp.eq.s32.totalorder %s21, 0
      %p172 = por %p170, %p171
      %p173 = scmp.ne.s32.totalorder %s162, %s165
      %p174 = scmp.eq.s32.totalorder %s26, 1
      %p175 = por %p173, %p174
      %p176 = scmp.ne.s32.totalorder %s165, %s166
      %p177 = scmp.eq.s32.totalorder %s26, 0
      %p178 = por %p176, %p177
      %p179 = scmp.ne.s32.totalorder %s165, %s166
      %p180 = scmp.eq.s32.totalorder %s27, 1
      %p181 = por %p179, %p180
      %p183 = scmp.ne.s32.totalorder %s166, %s182
      %p184 = scmp.eq.s32.totalorder %s27, 0
      %p185 = por %p183, %p184
      %p186 = scmp.le.s32.totalorder 1, %s21
      %p187 = scmp.lt.s32.totalorder %s21, 3
      %p188 = pnand %p186, %p187
      %p189 = pneg %p188
      // Predicated region
      $region9: #{tpu_custom_call.1} parent=5 // pred_check
        _
      $region10: #{tpu_custom_call.1} parent=5 // pred_check_branch
        %191 = sbr.rel (%p188) target = $region12
      $region11: #{tpu_custom_call.1} parent=5 // pred_region
        %s192 = ssub.s32 %s21, 1
        // Predicated region
        $region13: #{tpu_custom_call.1} parent=11 // pred_check
          %p193 = pneg %p68
        $region14: #{tpu_custom_call.1} parent=11 // pred_check_branch
          %195 = sbr.rel (%p193) target = $region16
        $region15: #{tpu_custom_call.1} parent=11 // pred_region
          %197 = vsyncadd [#allocation6], 0
          %s198 = sshll.u32 %s1, 4
          %s199 = int_to_ptr.hbm [resolvable:$true] %s198
          %s200 = sshll.u32 [#allocation5], 4
          %s201 = int_to_ptr.vmem [resolvable:$true] %s200
          %206 = dma.hbm_to_vmem [thread:$0]  %s199, 4096, %s201, [#allocation6], 256, 256, 16
        $region16: #{tpu_custom_call.1} parent=11 // pred_fallthru
          _
        // Predicated region
        $region17: #{tpu_custom_call.1} parent=11 // pred_check
          %p207 = pneg %p89
        $region18: #{tpu_custom_call.1} parent=11 // pred_check_branch
          %209 = sbr.rel (%p207) target = $region20
        $region19: #{tpu_custom_call.1} parent=11 // pred_region
          %211 = vsyncadd [#allocation6], 0
          %s212 = sshll.u32 %s2, 4
          %s213 = int_to_ptr.hbm [resolvable:$true] %s212
          %s214 = sshll.u32 [#allocation7], 4
          %s215 = int_to_ptr.vmem [resolvable:$true] %s214
          %220 = dma.hbm_to_vmem [thread:$0]  %s213, 768, %s215, [#allocation6], 128, 128, 8
        $region20: #{tpu_custom_call.1} parent=11 // pred_fallthru
          _
        // Predicated region
        $region21: #{tpu_custom_call.1} parent=11 // pred_check
          %p221 = pneg %p110
        $region22: #{tpu_custom_call.1} parent=11 // pred_check_branch
          %223 = sbr.rel (%p221) target = $region24
        $region23: #{tpu_custom_call.1} parent=11 // pred_region
          %225 = vsyncadd [#allocation9], 0
          %s226 = sshll.u32 %s3, 4
          %s227 = int_to_ptr.hbm [resolvable:$true] %s226
          %s228 = sshll.u32 [#allocation8], 4
          %s229 = int_to_ptr.vmem [resolvable:$true] %s228
          %234 = dma.hbm_to_vmem [thread:$0]  %s227, 24576, %s229, [#allocation9], 256, 256, 16
        $region24: #{tpu_custom_call.1} parent=11 // pred_fallthru
          _
        // Predicated region
        $region25: #{tpu_custom_call.1} parent=11 // pred_check
          %p235 = pneg %p131
        $region26: #{tpu_custom_call.1} parent=11 // pred_check_branch
          %237 = sbr.rel (%p235) target = $region28
        $region27: #{tpu_custom_call.1} parent=11 // pred_region
          %239 = vsyncadd [#allocation9], 0
          %s240 = sshll.u32 %s4, 4
          %s241 = int_to_ptr.hbm [resolvable:$true] %s240
          %s242 = sshll.u32 [#allocation10], 4
          %s243 = int_to_ptr.vmem [resolvable:$true] %s242
          %248 = dma.hbm_to_vmem [thread:$0]  %s241, 4096, %s243, [#allocation9], 128, 128, 8
        $region28: #{tpu_custom_call.1} parent=11 // pred_fallthru
          _
        // Predicated region
        $region29: #{tpu_custom_call.1} parent=11 // pred_check
          %p249 = pneg %p152
        $region30: #{tpu_custom_call.1} parent=11 // pred_check_branch
          %251 = sbr.rel (%p249) target = $region32
        $region31: #{tpu_custom_call.1} parent=11 // pred_region
          %253 = vsyncadd [#allocation12], 0
          %s255 = sshll.u32 %s5, 4
          %s256 = int_to_ptr.hbm [resolvable:$true] %s255
          %s257 = sshll.u32 [#allocation11], 4
          %s258 = int_to_ptr.vmem [resolvable:$true] %s257
          %260 = dma.hbm_to_vmem [thread:$0]  %s256, 128, %s258, [#allocation12]
        $region32: #{tpu_custom_call.1} parent=11 // pred_fallthru
          _
      $region12: #{tpu_custom_call.1} parent=5 // pred_fallthru
        _
      %p261 = scmp.lt.s32.totalorder %s21, 2
      // Predicated region
      $region33: #{tpu_custom_call.1} parent=5 // pred_check
        %p262 = pneg %p261
      $region34: #{tpu_custom_call.1} parent=5 // pred_check_branch
        %264 = sbr.rel (%p262) target = $region36
      $region35: #{tpu_custom_call.1} parent=5 // pred_region
        // Predicated region
        $region37: #{tpu_custom_call.1} parent=35 // pred_check
          %p265 = pneg %p41
        $region38: #{tpu_custom_call.1} parent=35 // pred_check_branch
          %267 = sbr.rel (%p265) target = $region40
        $region39: #{tpu_custom_call.1} parent=35 // pred_region
          %s268 = sand.u32 %s31, 1
          %s269 = scalar_lea.sflag [#allocation3], %s268
          %s270 = sand.u32 %s31, 1
          %s271 = smul.addr %s270, 16
          %s272 = scalar_lea.vmem [#allocation2], %s271
          %274 = vsyncadd %s269, 0
          %s275 = smul.addr %s21, 2
          %s276 = smul.addr %s275, 8
          %s277 = scalar_lea.hbm %s0, %s276
          %s278 = sshll.u32 %s277, 4
          %s279 = int_to_ptr.hbm [resolvable:$true] %s278
          %s280 = sshll.u32 %s272, 4
          %s281 = int_to_ptr.vmem [resolvable:$true] %s280
          %286 = dma.hbm_to_vmem [thread:$0]  %s279, 256, %s281, %s269, 128, 128, 8
        $region40: #{tpu_custom_call.1} parent=35 // pred_fallthru
          _
      $region36: #{tpu_custom_call.1} parent=5 // pred_fallthru
        _
      %p287 = scmp.le.s32.totalorder 1, %s21
      %p288 = scmp.lt.s32.totalorder %s21, 3
      %p289 = pnand %p287, %p288
      %p290 = pneg %p289
      // Predicated region
      $region41: #{tpu_custom_call.1} parent=5 // pred_check
        _
      $region42: #{tpu_custom_call.1} parent=5 // pred_check_branch
        %292 = sbr.rel (%p289) target = $region44
      $region43: #{tpu_custom_call.1} parent=5 // pred_region
        %s293 = ssub.s32 %s21, 1
        %s294 = sand.u32 %s34, 1
        %s295 = scalar_lea.sflag [#allocation3], %s294
        %s296 = sand.u32 %s34, 1
        %s297 = smul.addr %s296, 16
        %s298 = scalar_lea.vmem [#allocation2], %s297
        // Predicated region
        $region45: #{tpu_custom_call.1} parent=43 // pred_check
          %p299 = pneg %p47
        $region46: #{tpu_custom_call.1} parent=43 // pred_check_branch
          %301 = sbr.rel (%p299) target = $region48
        $region47: #{tpu_custom_call.1} parent=43 // pred_region
          %303 = dma.done %s295, 256
        $region48: #{tpu_custom_call.1} parent=43 // pred_fallthru
          _
        // Predicated region
        $region49: #{tpu_custom_call.1} parent=43 // pred_check
          %p304 = pneg %p68
        $region50: #{tpu_custom_call.1} parent=43 // pred_check_branch
          %306 = sbr.rel (%p304) target = $region52
        $region51: #{tpu_custom_call.1} parent=43 // pred_region
          %308 = dma.done [#allocation6], 4096
        $region52: #{tpu_custom_call.1} parent=43 // pred_fallthru
          _
        // Predicated region
        $region53: #{tpu_custom_call.1} parent=43 // pred_check
          %p309 = pneg %p89
        $region54: #{tpu_custom_call.1} parent=43 // pred_check_branch
          %311 = sbr.rel (%p309) target = $region56
        $region55: #{tpu_custom_call.1} parent=43 // pred_region
          %313 = dma.done [#allocation6], 768
        $region56: #{tpu_custom_call.1} parent=43 // pred_fallthru
          _
        // Predicated region
        $region57: #{tpu_custom_call.1} parent=43 // pred_check
          %p314 = pneg %p110
        $region58: #{tpu_custom_call.1} parent=43 // pred_check_branch
          %316 = sbr.rel (%p314) target = $region60
        $region59: #{tpu_custom_call.1} parent=43 // pred_region
          %318 = dma.done [#allocation9], 24576
        $region60: #{tpu_custom_call.1} parent=43 // pred_fallthru
          _
        // Predicated region
        $region61: #{tpu_custom_call.1} parent=43 // pred_check
          %p319 = pneg %p131
        $region62: #{tpu_custom_call.1} parent=43 // pred_check_branch
          %321 = sbr.rel (%p319) target = $region64
        $region63: #{tpu_custom_call.1} parent=43 // pred_region
          %323 = dma.done [#allocation9], 4096
        $region64: #{tpu_custom_call.1} parent=43 // pred_fallthru
          _
        // Predicated region
        $region65: #{tpu_custom_call.1} parent=43 // pred_check
          %p324 = pneg %p152
        $region66: #{tpu_custom_call.1} parent=43 // pred_check_branch
          %326 = sbr.rel (%p324) target = $region68
        $region67: #{tpu_custom_call.1} parent=43 // pred_region
          %328 = dma.done [#allocation12], 128
        $region68: #{tpu_custom_call.1} parent=43 // pred_fallthru
          _
        %s329 = sand.u32 %s34, 1
        %s330 = scalar_lea.sflag [#allocation3], %s329
        %s331 = sand.u32 %s34, 1
        %s332 = smul.addr %s331, 16
        %s333 = scalar_lea.vmem [#allocation2], %s332
        %p334 = pneg %p47
        %p335 = pneg %p44
        %p336 = pneg %p68
        %p337 = pneg %p65
        %p338 = pneg %p89
        %p339 = pneg %p86
        %p340 = pneg %p110
        %p341 = pneg %p107
        %p342 = pneg %p131
        %p343 = pneg %p128
        %p344 = pneg %p152
        %p345 = pneg %p149
        %p346 = pneg %p178
        %p347 = pneg %p175
        %s348 = sand.u32 %s165, 1
        %s349 = scalar_lea.sflag [#allocation4], %s348
        %s350 = sand.u32 %s165, 1
        %s351 = smul.addr %s350, 16
        %s352 = scalar_lea.vmem [#allocation13], %s351
        %v353 = vld [vmem:[%s298] sm:$0xff]
        %v354 = vld [vmem:[%s298 + $0x8] sm:$0xff]
        %v355 = vld [vmem:[#allocation5] sm:$0xff]
        %v356 = vld [vmem:[#allocation5 + $0x8] sm:$0xff]
        %v357 = vld [vmem:[#allocation5 + $0x10] sm:$0xff]
        %v358 = vld [vmem:[#allocation5 + $0x18] sm:$0xff]
        %v359 = vld [vmem:[#allocation5 + $0x20] sm:$0xff]
        %v360 = vld [vmem:[#allocation5 + $0x28] sm:$0xff]
        %v361 = vld [vmem:[#allocation5 + $0x30] sm:$0xff]
        %v362 = vld [vmem:[#allocation5 + $0x38] sm:$0xff]
        %v363 = vld [vmem:[#allocation5 + $0x40] sm:$0xff]
        %v364 = vld [vmem:[#allocation5 + $0x48] sm:$0xff]
        %v365 = vld [vmem:[#allocation5 + $0x50] sm:$0xff]
        %v366 = vld [vmem:[#allocation5 + $0x58] sm:$0xff]
        %v367 = vld [vmem:[#allocation5 + $0x60] sm:$0xff]
        %v368 = vld [vmem:[#allocation5 + $0x68] sm:$0xff]
        %v369 = vld [vmem:[#allocation5 + $0x70] sm:$0xff]
        %v370 = vld [vmem:[#allocation5 + $0x78] sm:$0xff]
        %v371 = vld [vmem:[#allocation5 + $0x80] sm:$0xff]
        %v372 = vld [vmem:[#allocation5 + $0x88] sm:$0xff]
        %v373 = vld [vmem:[#allocation5 + $0x90] sm:$0xff]
        %v374 = vld [vmem:[#allocation5 + $0x98] sm:$0xff]
        %v375 = vld [vmem:[#allocation5 + $0xa0] sm:$0xff]
        %v376 = vld [vmem:[#allocation5 + $0xa8] sm:$0xff]
        %v377 = vld [vmem:[#allocation5 + $0xb0] sm:$0xff]
        %v378 = vld [vmem:[#allocation5 + $0xb8] sm:$0xff]
        %v379 = vld [vmem:[#allocation5 + $0xc0] sm:$0xff]
        %v380 = vld [vmem:[#allocation5 + $0xc8] sm:$0xff]
        %v381 = vld [vmem:[#allocation5 + $0xd0] sm:$0xff]
        %v382 = vld [vmem:[#allocation5 + $0xd8] sm:$0xff]
        %v383 = vld [vmem:[#allocation5 + $0xe0] sm:$0xff]
        %v384 = vld [vmem:[#allocation5 + $0xe8] sm:$0xff]
        %v385 = vld [vmem:[#allocation5 + $0xf0] sm:$0xff]
        %v386 = vld [vmem:[#allocation5 + $0xf8] sm:$0xff]
        %v387 = vld [vmem:[#allocation11] ss:$4 sm:$0x3]
        %v389 = vperm.slane %v387, 0
        %v390 = vperm.slane %v387, 1
        %393 = vmatpush.msra.mxu0 %v385
        %394 = vmatpush.msra.mxu0 %v383
        %395 = vmatpush.msra.mxu0 %v381
        %396 = vmatpush.msra.mxu0 %v379
        %397 = vmatpush.msra.mxu0 %v377
        %398 = vmatpush.msra.mxu0 %v375
        %399 = vmatpush.msra.mxu0 %v373
        %400 = vmatpush.msra.mxu0 %v371
        %401 = vmatpush.msra.mxu0 %v369
        %402 = vmatpush.msra.mxu0 %v367
        %403 = vmatpush.msra.mxu0 %v365
        %404 = vmatpush.msra.mxu0 %v363
        %405 = vmatpush.msra.mxu0 %v361
        %406 = vmatpush.msra.mxu0 %v359
        %407 = vmatpush.msra.mxu0 %v357
        %408 = vmatpush.msra.mxu0 %v355
        %409 = vmatmul.f32.gmra.mxu0 %v353
        %v410 = vpop.f32.mrf.mxu0
        %v411 = vadd.f32 %v389, %v410
        %412 = vmatmul.f32.gmra.mxu0 %v354
        %v413 = vpop.f32.mrf.mxu0
        %v414 = vadd.f32 %v389, %v413
        %415 = vdwg.mxu0
        %416 = vmatpush.msra.mxu0 %v386
        %417 = vmatpush.msra.mxu0 %v384
        %418 = vmatpush.msra.mxu0 %v382
        %419 = vmatpush.msra.mxu0 %v380
        %420 = vmatpush.msra.mxu0 %v378
        %421 = vmatpush.msra.mxu0 %v376
        %422 = vmatpush.msra.mxu0 %v374
        %423 = vmatpush.msra.mxu0 %v372
        %424 = vmatpush.msra.mxu0 %v370
        %425 = vmatpush.msra.mxu0 %v368
        %426 = vmatpush.msra.mxu0 %v366
        %427 = vmatpush.msra.mxu0 %v364
        %428 = vmatpush.msra.mxu0 %v362
        %429 = vmatpush.msra.mxu0 %v360
        %430 = vmatpush.msra.mxu0 %v358
        %431 = vmatpush.msra.mxu0 %v356
        %432 = vmatmul.f32.gmra.mxu0 %v353
        %v433 = vpop.f32.mrf.mxu0
        %v434 = vadd.f32 %v390, %v433
        %435 = vmatmul.f32.gmra.mxu0 %v354
        %v436 = vpop.f32.mrf.mxu0
        %v437 = vadd.f32 %v390, %v436
        %438 = vdwg.mxu0
        %v439 = vmax.f32 %v411, 0.0
        %v440 = vmax.f32 %v434, 0.0
        %v441 = vmax.f32 %v414, 0.0
        %v442 = vmax.f32 %v437, 0.0
        %v443 = vld [vmem:[#allocation7] sm:$0xff]
        %v444 = vld [vmem:[#allocation7 + $0x8] sm:$0xff]
        %vm445 = vcmask 130048
        %v447 = vsel %vm445, %v443, 0
        %v450 = vsel %vm445, %v444, 0
        %452 = vmatpush.msra.mxu0 0.0
        %453 = vmatpush.msra.mxu0 0.0
        %454 = vmatpush.msra.mxu0 0.0
        %455 = vmatpush.msra.mxu0 0.0
        %456 = vmatpush.msra.mxu0 0.0
        %457 = vmatpush.msra.mxu0 0.0
        %458 = vmatpush.msra.mxu0 0.0
        %459 = vmatpush.msra.mxu0 0.0
        %460 = vmatpush.msra.mxu0 0.0
        %461 = vmatpush.msra.mxu0 0.0
        %462 = vmatpush.msra.mxu0 0.0
        %463 = vmatpush.msra.mxu0 0.0
        %464 = vmatpush.msra.mxu0 0.0
        %465 = vmatpush.msra.mxu0 0.0
        %466 = vmatpush.msra.mxu0 %v441
        %467 = vmatpush.msra.mxu0 %v439
        %468 = vmatmul.f32.gmra.mxu0 %v447
        %v469 = vpop.f32.mrf.mxu0
        %v470 = vadd.f32 0.0, %v469
        %471 = vmatmul.f32.gmra.mxu0 %v450
        %v472 = vpop.f32.mrf.mxu0
        %v473 = vadd.f32 0.0, %v472
        %474 = vdwg.mxu0
        %475 = vmatpush.msra.mxu0 0.0
        %476 = vmatpush.msra.mxu0 0.0
        %477 = vmatpush.msra.mxu0 0.0
        %478 = vmatpush.msra.mxu0 0.0
        %479 = vmatpush.msra.mxu0 0.0
        %480 = vmatpush.msra.mxu0 0.0
        %481 = vmatpush.msra.mxu0 0.0
        %482 = vmatpush.msra.mxu0 0.0
        %483 = vmatpush.msra.mxu0 0.0
        %484 = vmatpush.msra.mxu0 0.0
        %485 = vmatpush.msra.mxu0 0.0
        %486 = vmatpush.msra.mxu0 0.0
        %487 = vmatpush.msra.mxu0 0.0
        %488 = vmatpush.msra.mxu0 0.0
        %489 = vmatpush.msra.mxu0 %v442
        %490 = vmatpush.msra.mxu0 %v440
        %491 = vmatmul.f32.gmra.mxu0 %v447
        %v492 = vpop.f32.mrf.mxu0
        %v493 = vadd.f32 0.0, %v492
        %494 = vmatmul.f32.gmra.mxu0 %v450
        %v495 = vpop.f32.mrf.mxu0
        %v496 = vadd.f32 0.0, %v495
        %497 = vdwg.mxu0
        %v498 = vld [vmem:[#allocation8] sm:$0xff]
        %v499 = vld [vmem:[#allocation8 + $0x8] sm:$0xff]
        %v500 = vld [vmem:[#allocation8 + $0x10] sm:$0xff]
        %v501 = vld [vmem:[#allocation8 + $0x18] sm:$0xff]
        %v502 = vld [vmem:[#allocation8 + $0x20] sm:$0xff]
        %v503 = vld [vmem:[#allocation8 + $0x28] sm:$0xff]
        %v504 = vld [vmem:[#allocation8 + $0x30] sm:$0xff]
        %v505 = vld [vmem:[#allocation8 + $0x38] sm:$0xff]
        %v506 = vld [vmem:[#allocation8 + $0x40] sm:$0xff]
        %v507 = vld [vmem:[#allocation8 + $0x48] sm:$0xff]
        %v508 = vld [vmem:[#allocation8 + $0x50] sm:$0xff]
        %v509 = vld [vmem:[#allocation8 + $0x58] sm:$0xff]
        %v510 = vld [vmem:[#allocation8 + $0x60] sm:$0xff]
        %v511 = vld [vmem:[#allocation8 + $0x68] sm:$0xff]
        %v512 = vld [vmem:[#allocation8 + $0x70] sm:$0xff]
        %v513 = vld [vmem:[#allocation8 + $0x78] sm:$0xff]
        %v514 = vld [vmem:[#allocation8 + $0x80] sm:$0xff]
        %v515 = vld [vmem:[#allocation8 + $0x88] sm:$0xff]
        %v516 = vld [vmem:[#allocation8 + $0x90] sm:$0xff]
        %v517 = vld [vmem:[#allocation8 + $0x98] sm:$0xff]
        %v518 = vld [vmem:[#allocation8 + $0xa0] sm:$0xff]
        %v519 = vld [vmem:[#allocation8 + $0xa8] sm:$0xff]
        %v520 = vld [vmem:[#allocation8 + $0xb0] sm:$0xff]
        %v521 = vld [vmem:[#allocation8 + $0xb8] sm:$0xff]
        %v522 = vld [vmem:[#allocation8 + $0xc0] sm:$0xff]
        %v523 = vld [vmem:[#allocation8 + $0xc8] sm:$0xff]
        %v524 = vld [vmem:[#allocation8 + $0xd0] sm:$0xff]
        %v525 = vld [vmem:[#allocation8 + $0xd8] sm:$0xff]
        %v526 = vld [vmem:[#allocation8 + $0xe0] sm:$0xff]
        %v527 = vld [vmem:[#allocation8 + $0xe8] sm:$0xff]
        %v528 = vld [vmem:[#allocation8 + $0xf0] sm:$0xff]
        %v529 = vld [vmem:[#allocation8 + $0xf8] sm:$0xff]
        %v530 = vld [vmem:[#allocation8 + $0x100] sm:$0xff]
        %v531 = vld [vmem:[#allocation8 + $0x108] sm:$0xff]
        %v532 = vld [vmem:[#allocation8 + $0x110] sm:$0xff]
        %v533 = vld [vmem:[#allocation8 + $0x118] sm:$0xff]
        %v534 = vld [vmem:[#allocation8 + $0x120] sm:$0xff]
        %v535 = vld [vmem:[#allocation8 + $0x128] sm:$0xff]
        %v536 = vld [vmem:[#allocation8 + $0x130] sm:$0xff]
        %v537 = vld [vmem:[#allocation8 + $0x138] sm:$0xff]
        %v538 = vld [vmem:[#allocation8 + $0x140] sm:$0xff]
        %v539 = vld [vmem:[#allocation8 + $0x148] sm:$0xff]
        %v540 = vld [vmem:[#allocation8 + $0x150] sm:$0xff]
        %v541 = vld [vmem:[#allocation8 + $0x158] sm:$0xff]
        %v542 = vld [vmem:[#allocation8 + $0x160] sm:$0xff]
        %v543 = vld [vmem:[#allocation8 + $0x168] sm:$0xff]
        %v544 = vld [vmem:[#allocation8 + $0x170] sm:$0xff]
        %v545 = vld [vmem:[#allocation8 + $0x178] sm:$0xff]
        %v546 = vld [vmem:[#allocation8 + $0x180] sm:$0xff]
        %v547 = vld [vmem:[#allocation8 + $0x188] sm:$0xff]
        %v548 = vld [vmem:[#allocation8 + $0x190] sm:$0xff]
        %v549 = vld [vmem:[#allocation8 + $0x198] sm:$0xff]
        %v550 = vld [vmem:[#allocation8 + $0x1a0] sm:$0xff]
        %v551 = vld [vmem:[#allocation8 + $0x1a8] sm:$0xff]
        %v552 = vld [vmem:[#allocation8 + $0x1b0] sm:$0xff]
        %v553 = vld [vmem:[#allocation8 + $0x1b8] sm:$0xff]
        %v554 = vld [vmem:[#allocation8 + $0x1c0] sm:$0xff]
        %v555 = vld [vmem:[#allocation8 + $0x1c8] sm:$0xff]
        %v556 = vld [vmem:[#allocation8 + $0x1d0] sm:$0xff]
        %v557 = vld [vmem:[#allocation8 + $0x1d8] sm:$0xff]
        %v558 = vld [vmem:[#allocation8 + $0x1e0] sm:$0xff]
        %v559 = vld [vmem:[#allocation8 + $0x1e8] sm:$0xff]
        %v560 = vld [vmem:[#allocation8 + $0x1f0] sm:$0xff]
        %v561 = vld [vmem:[#allocation8 + $0x1f8] sm:$0xff]
        %s562 = scalar_lea.vmem [#allocation7], 16
        %v563 = vld [vmem:[%s562] sm:$0xff]
        %v564 = vld [vmem:[%s562 + $0x8] sm:$0xff]
        %v566 = vsel %vm445, %v563, 0
        %v569 = vsel %vm445, %v564, 0
        %571 = vmatpush.msra.mxu0 0.0
        %572 = vmatpush.msra.mxu0 0.0
        %573 = vmatpush.msra.mxu0 0.0
        %574 = vmatpush.msra.mxu0 0.0
        %575 = vmatpush.msra.mxu0 0.0
        %576 = vmatpush.msra.mxu0 0.0
        %577 = vmatpush.msra.mxu0 0.0
        %578 = vmatpush.msra.mxu0 0.0
        %579 = vmatpush.msra.mxu0 0.0
        %580 = vmatpush.msra.mxu0 0.0
        %581 = vmatpush.msra.mxu0 0.0
        %582 = vmatpush.msra.mxu0 0.0
        %583 = vmatpush.msra.mxu0 0.0
        %584 = vmatpush.msra.mxu0 0.0
        %585 = vmatpush.msra.mxu0 %v441
        %586 = vmatpush.msra.mxu0 %v439
        %587 = vmatmul.f32.gmra.mxu0 %v566
        %v588 = vpop.f32.mrf.mxu0
        %v589 = vadd.f32 0.0, %v588
        %590 = vmatmul.f32.gmra.mxu0 %v569
        %v591 = vpop.f32.mrf.mxu0
        %v592 = vadd.f32 0.0, %v591
        %593 = vdwg.mxu0
        %594 = vmatpush.msra.mxu0 0.0
        %595 = vmatpush.msra.mxu0 0.0
        %596 = vmatpush.msra.mxu0 0.0
        %597 = vmatpush.msra.mxu0 0.0
        %598 = vmatpush.msra.mxu0 0.0
        %599 = vmatpush.msra.mxu0 0.0
        %600 = vmatpush.msra.mxu0 0.0
        %601 = vmatpush.msra.mxu0 0.0
        %602 = vmatpush.msra.mxu0 0.0
        %603 = vmatpush.msra.mxu0 0.0
        %604 = vmatpush.msra.mxu0 0.0
        %605 = vmatpush.msra.mxu0 0.0
        %606 = vmatpush.msra.mxu0 0.0
        %607 = vmatpush.msra.mxu0 0.0
        %608 = vmatpush.msra.mxu0 %v442
        %609 = vmatpush.msra.mxu0 %v440
        %610 = vmatmul.f32.gmra.mxu0 %v566
        %v611 = vpop.f32.mrf.mxu0
        %v612 = vadd.f32 0.0, %v611
        %613 = vmatmul.f32.gmra.mxu0 %v569
        %v614 = vpop.f32.mrf.mxu0
        %v615 = vadd.f32 0.0, %v614
        %616 = vdwg.mxu0
        %s617 = scalar_lea.vmem [#allocation8], 512
        %v618 = vld [vmem:[%s617] sm:$0xff]
        %v619 = vld [vmem:[%s617 + $0x8] sm:$0xff]
        %v620 = vld [vmem:[%s617 + $0x10] sm:$0xff]
        %v621 = vld [vmem:[%s617 + $0x18] sm:$0xff]
        %v622 = vld [vmem:[%s617 + $0x20] sm:$0xff]
        %v623 = vld [vmem:[%s617 + $0x28] sm:$0xff]
        %v624 = vld [vmem:[%s617 + $0x30] sm:$0xff]
        %v625 = vld [vmem:[%s617 + $0x38] sm:$0xff]
        %v626 = vld [vmem:[%s617 + $0x40] sm:$0xff]
        %v627 = vld [vmem:[%s617 + $0x48] sm:$0xff]
        %v628 = vld [vmem:[%s617 + $0x50] sm:$0xff]
        %v629 = vld [vmem:[%s617 + $0x58] sm:$0xff]
        %v630 = vld [vmem:[%s617 + $0x60] sm:$0xff]
        %v631 = vld [vmem:[%s617 + $0x68] sm:$0xff]
        %v632 = vld [vmem:[%s617 + $0x70] sm:$0xff]
        %v633 = vld [vmem:[%s617 + $0x78] sm:$0xff]
        %v634 = vld [vmem:[%s617 + $0x80] sm:$0xff]
        %v635 = vld [vmem:[%s617 + $0x88] sm:$0xff]
        %v636 = vld [vmem:[%s617 + $0x90] sm:$0xff]
        %v637 = vld [vmem:[%s617 + $0x98] sm:$0xff]
        %v638 = vld [vmem:[%s617 + $0xa0] sm:$0xff]
        %v639 = vld [vmem:[%s617 + $0xa8] sm:$0xff]
        %v640 = vld [vmem:[%s617 + $0xb0] sm:$0xff]
        %v641 = vld [vmem:[%s617 + $0xb8] sm:$0xff]
        %v642 = vld [vmem:[%s617 + $0xc0] sm:$0xff]
        %v643 = vld [vmem:[%s617 + $0xc8] sm:$0xff]
        %v644 = vld [vmem:[%s617 + $0xd0] sm:$0xff]
        %v645 = vld [vmem:[%s617 + $0xd8] sm:$0xff]
        %v646 = vld [vmem:[%s617 + $0xe0] sm:$0xff]
        %v647 = vld [vmem:[%s617 + $0xe8] sm:$0xff]
        %v648 = vld [vmem:[%s617 + $0xf0] sm:$0xff]
        %v649 = vld [vmem:[%s617 + $0xf8] sm:$0xff]
        %v650 = vld [vmem:[%s617 + $0x100] sm:$0xff]
        %v651 = vld [vmem:[%s617 + $0x108] sm:$0xff]
        %v652 = vld [vmem:[%s617 + $0x110] sm:$0xff]
        %v653 = vld [vmem:[%s617 + $0x118] sm:$0xff]
        %v654 = vld [vmem:[%s617 + $0x120] sm:$0xff]
        %v655 = vld [vmem:[%s617 + $0x128] sm:$0xff]
        %v656 = vld [vmem:[%s617 + $0x130] sm:$0xff]
        %v657 = vld [vmem:[%s617 + $0x138] sm:$0xff]
        %v658 = vld [vmem:[%s617 + $0x140] sm:$0xff]
        %v659 = vld [vmem:[%s617 + $0x148] sm:$0xff]
        %v660 = vld [vmem:[%s617 + $0x150] sm:$0xff]
        %v661 = vld [vmem:[%s617 + $0x158] sm:$0xff]
        %v662 = vld [vmem:[%s617 + $0x160] sm:$0xff]
        %v663 = vld [vmem:[%s617 + $0x168] sm:$0xff]
        %v664 = vld [vmem:[%s617 + $0x170] sm:$0xff]
        %v665 = vld [vmem:[%s617 + $0x178] sm:$0xff]
        %v666 = vld [vmem:[%s617 + $0x180] sm:$0xff]
        %v667 = vld [vmem:[%s617 + $0x188] sm:$0xff]
        %v668 = vld [vmem:[%s617 + $0x190] sm:$0xff]
        %v669 = vld [vmem:[%s617 + $0x198] sm:$0xff]
        %v670 = vld [vmem:[%s617 + $0x1a0] sm:$0xff]
        %v671 = vld [vmem:[%s617 + $0x1a8] sm:$0xff]
        %v672 = vld [vmem:[%s617 + $0x1b0] sm:$0xff]
        %v673 = vld [vmem:[%s617 + $0x1b8] sm:$0xff]
        %v674 = vld [vmem:[%s617 + $0x1c0] sm:$0xff]
        %v675 = vld [vmem:[%s617 + $0x1c8] sm:$0xff]
        %v676 = vld [vmem:[%s617 + $0x1d0] sm:$0xff]
        %v677 = vld [vmem:[%s617 + $0x1d8] sm:$0xff]
        %v678 = vld [vmem:[%s617 + $0x1e0] sm:$0xff]
        %v679 = vld [vmem:[%s617 + $0x1e8] sm:$0xff]
        %v680 = vld [vmem:[%s617 + $0x1f0] sm:$0xff]
        %v681 = vld [vmem:[%s617 + $0x1f8] sm:$0xff]
        %682 = vmatpush.msra.mxu0 %v648
        %683 = vmatpush.msra.mxu0 %v646
        %684 = vmatpush.msra.mxu0 %v644
        %685 = vmatpush.msra.mxu0 %v642
        %686 = vmatpush.msra.mxu0 %v640
        %687 = vmatpush.msra.mxu0 %v638
        %688 = vmatpush.msra.mxu0 %v636
        %689 = vmatpush.msra.mxu0 %v634
        %690 = vmatpush.msra.mxu0 %v632
        %691 = vmatpush.msra.mxu0 %v630
        %692 = vmatpush.msra.mxu0 %v628
        %693 = vmatpush.msra.mxu0 %v626
        %694 = vmatpush.msra.mxu0 %v624
        %695 = vmatpush.msra.mxu0 %v622
        %696 = vmatpush.msra.mxu0 %v620
        %697 = vmatpush.msra.mxu0 %v618
        %698 = vmatmul.f32.gmra.mxu0 %v589
        %v699 = vpop.f32.mrf.mxu0
        %v700 = vadd.f32 0.0, %v699
        %701 = vmatmul.f32.gmra.mxu0 %v592
        %v702 = vpop.f32.mrf.mxu0
        %v703 = vadd.f32 0.0, %v702
        %704 = vdwg.mxu0
        %705 = vmatpush.msra.mxu0 %v680
        %706 = vmatpush.msra.mxu0 %v678
        %707 = vmatpush.msra.mxu0 %v676
        %708 = vmatpush.msra.mxu0 %v674
        %709 = vmatpush.msra.mxu0 %v672
        %710 = vmatpush.msra.mxu0 %v670
        %711 = vmatpush.msra.mxu0 %v668
        %712 = vmatpush.msra.mxu0 %v666
        %713 = vmatpush.msra.mxu0 %v664
        %714 = vmatpush.msra.mxu0 %v662
        %715 = vmatpush.msra.mxu0 %v660
        %716 = vmatpush.msra.mxu0 %v658
        %717 = vmatpush.msra.mxu0 %v656
        %718 = vmatpush.msra.mxu0 %v654
        %719 = vmatpush.msra.mxu0 %v652
        %720 = vmatpush.msra.mxu0 %v650
        %721 = vmatmul.f32.gmra.mxu0 %v612
        %v722 = vpop.f32.mrf.mxu0
        %v723 = vadd.f32 %v700, %v722
        %724 = vmatmul.f32.gmra.mxu0 %v615
        %v725 = vpop.f32.mrf.mxu0
        %v726 = vadd.f32 %v703, %v725
        %727 = vdwg.mxu0
        %728 = vmatpush.msra.mxu0 %v649
        %729 = vmatpush.msra.mxu0 %v647
        %730 = vmatpush.msra.mxu0 %v645
        %731 = vmatpush.msra.mxu0 %v643
        %732 = vmatpush.msra.mxu0 %v641
        %733 = vmatpush.msra.mxu0 %v639
        %734 = vmatpush.msra.mxu0 %v637
        %735 = vmatpush.msra.mxu0 %v635
        %736 = vmatpush.msra.mxu0 %v633
        %737 = vmatpush.msra.mxu0 %v631
        %738 = vmatpush.msra.mxu0 %v629
        %739 = vmatpush.msra.mxu0 %v627
        %740 = vmatpush.msra.mxu0 %v625
        %741 = vmatpush.msra.mxu0 %v623
        %742 = vmatpush.msra.mxu0 %v621
        %743 = vmatpush.msra.mxu0 %v619
        %744 = vmatmul.f32.gmra.mxu0 %v589
        %v745 = vpop.f32.mrf.mxu0
        %v746 = vadd.f32 0.0, %v745
        %747 = vmatmul.f32.gmra.mxu0 %v592
        %v748 = vpop.f32.mrf.mxu0
        %v749 = vadd.f32 0.0, %v748
        %750 = vdwg.mxu0
        %751 = vmatpush.msra.mxu0 %v681
        %752 = vmatpush.msra.mxu0 %v679
        %753 = vmatpush.msra.mxu0 %v677
        %754 = vmatpush.msra.mxu0 %v675
        %755 = vmatpush.msra.mxu0 %v673
        %756 = vmatpush.msra.mxu0 %v671
        %757 = vmatpush.msra.mxu0 %v669
        %758 = vmatpush.msra.mxu0 %v667
        %759 = vmatpush.msra.mxu0 %v665
        %760 = vmatpush.msra.mxu0 %v663
        %761 = vmatpush.msra.mxu0 %v661
        %762 = vmatpush.msra.mxu0 %v659
        %763 = vmatpush.msra.mxu0 %v657
        %764 = vmatpush.msra.mxu0 %v655
        %765 = vmatpush.msra.mxu0 %v653
        %766 = vmatpush.msra.mxu0 %v651
        %767 = vmatmul.f32.gmra.mxu0 %v612
        %v768 = vpop.f32.mrf.mxu0
        %v769 = vadd.f32 %v746, %v768
        %770 = vmatmul.f32.gmra.mxu0 %v615
        %v771 = vpop.f32.mrf.mxu0
        %v772 = vadd.f32 %v749, %v771
        %773 = vdwg.mxu0
        %774 = vmatpush.msra.mxu0 %v528
        %775 = vmatpush.msra.mxu0 %v526
        %776 = vmatpush.msra.mxu0 %v524
        %777 = vmatpush.msra.mxu0 %v522
        %778 = vmatpush.msra.mxu0 %v520
        %779 = vmatpush.msra.mxu0 %v518
        %780 = vmatpush.msra.mxu0 %v516
        %781 = vmatpush.msra.mxu0 %v514
        %782 = vmatpush.msra.mxu0 %v512
        %783 = vmatpush.msra.mxu0 %v510
        %784 = vmatpush.msra.mxu0 %v508
        %785 = vmatpush.msra.mxu0 %v506
        %786 = vmatpush.msra.mxu0 %v504
        %787 = vmatpush.msra.mxu0 %v502
        %788 = vmatpush.msra.mxu0 %v500
        %789 = vmatpush.msra.mxu0 %v498
        %790 = vmatmul.f32.gmra.mxu0 %v470
        %v791 = vpop.f32.mrf.mxu0
        %v792 = vadd.f32 %v723, %v791
        %793 = vmatmul.f32.gmra.mxu0 %v473
        %v794 = vpop.f32.mrf.mxu0
        %v795 = vadd.f32 %v726, %v794
        %796 = vdwg.mxu0
        %797 = vmatpush.msra.mxu0 %v560
        %798 = vmatpush.msra.mxu0 %v558
        %799 = vmatpush.msra.mxu0 %v556
        %800 = vmatpush.msra.mxu0 %v554
        %801 = vmatpush.msra.mxu0 %v552
        %802 = vmatpush.msra.mxu0 %v550
        %803 = vmatpush.msra.mxu0 %v548
        %804 = vmatpush.msra.mxu0 %v546
        %805 = vmatpush.msra.mxu0 %v544
        %806 = vmatpush.msra.mxu0 %v542
        %807 = vmatpush.msra.mxu0 %v540
        %808 = vmatpush.msra.mxu0 %v538
        %809 = vmatpush.msra.mxu0 %v536
        %810 = vmatpush.msra.mxu0 %v534
        %811 = vmatpush.msra.mxu0 %v532
        %812 = vmatpush.msra.mxu0 %v530
        %813 = vmatmul.f32.gmra.mxu0 %v493
        %v814 = vpop.f32.mrf.mxu0
        %v815 = vadd.f32 %v792, %v814
        %816 = vmatmul.f32.gmra.mxu0 %v496
        %v817 = vpop.f32.mrf.mxu0
        %v818 = vadd.f32 %v795, %v817
        %819 = vdwg.mxu0
        %820 = vmatpush.msra.mxu0 %v529
        %821 = vmatpush.msra.mxu0 %v527
        %822 = vmatpush.msra.mxu0 %v525
        %823 = vmatpush.msra.mxu0 %v523
        %824 = vmatpush.msra.mxu0 %v521
        %825 = vmatpush.msra.mxu0 %v519
        %826 = vmatpush.msra.mxu0 %v517
        %827 = vmatpush.msra.mxu0 %v515
        %828 = vmatpush.msra.mxu0 %v513
        %829 = vmatpush.msra.mxu0 %v511
        %830 = vmatpush.msra.mxu0 %v509
        %831 = vmatpush.msra.mxu0 %v507
        %832 = vmatpush.msra.mxu0 %v505
        %833 = vmatpush.msra.mxu0 %v503
        %834 = vmatpush.msra.mxu0 %v501
        %835 = vmatpush.msra.mxu0 %v499
        %836 = vmatmul.f32.gmra.mxu0 %v470
        %v837 = vpop.f32.mrf.mxu0
        %v838 = vadd.f32 %v769, %v837
        %839 = vmatmul.f32.gmra.mxu0 %v473
        %v840 = vpop.f32.mrf.mxu0
        %v841 = vadd.f32 %v772, %v840
        %842 = vdwg.mxu0
        %843 = vmatpush.msra.mxu0 %v561
        %844 = vmatpush.msra.mxu0 %v559
        %845 = vmatpush.msra.mxu0 %v557
        %846 = vmatpush.msra.mxu0 %v555
        %847 = vmatpush.msra.mxu0 %v553
        %848 = vmatpush.msra.mxu0 %v551
        %849 = vmatpush.msra.mxu0 %v549
        %850 = vmatpush.msra.mxu0 %v547
        %851 = vmatpush.msra.mxu0 %v545
        %852 = vmatpush.msra.mxu0 %v543
        %853 = vmatpush.msra.mxu0 %v541
        %854 = vmatpush.msra.mxu0 %v539
        %855 = vmatpush.msra.mxu0 %v537
        %856 = vmatpush.msra.mxu0 %v535
        %857 = vmatpush.msra.mxu0 %v533
        %858 = vmatpush.msra.mxu0 %v531
        %859 = vmatmul.f32.gmra.mxu0 %v493
        %v860 = vpop.f32.mrf.mxu0
        %v861 = vadd.f32 %v838, %v860
        %862 = vmatmul.f32.gmra.mxu0 %v496
        %v863 = vpop.f32.mrf.mxu0
        %v864 = vadd.f32 %v841, %v863
        %865 = vdwg.mxu0
        %s866 = scalar_lea.vmem [#allocation7], 32
        %v867 = vld [vmem:[%s866] sm:$0xff]
        %v868 = vld [vmem:[%s866 + $0x8] sm:$0xff]
        %v870 = vsel %vm445, %v867, 0
        %v873 = vsel %vm445, %v868, 0
        %875 = vmatpush.msra.mxu0 0.0
        %876 = vmatpush.msra.mxu0 0.0
        %877 = vmatpush.msra.mxu0 0.0
        %878 = vmatpush.msra.mxu0 0.0
        %879 = vmatpush.msra.mxu0 0.0
        %880 = vmatpush.msra.mxu0 0.0
        %881 = vmatpush.msra.mxu0 0.0
        %882 = vmatpush.msra.mxu0 0.0
        %883 = vmatpush.msra.mxu0 0.0
        %884 = vmatpush.msra.mxu0 0.0
        %885 = vmatpush.msra.mxu0 0.0
        %886 = vmatpush.msra.mxu0 0.0
        %887 = vmatpush.msra.mxu0 0.0
        %888 = vmatpush.msra.mxu0 0.0
        %889 = vmatpush.msra.mxu0 %v441
        %890 = vmatpush.msra.mxu0 %v439
        %891 = vmatmul.f32.gmra.mxu0 %v870
        %v892 = vpop.f32.mrf.mxu0
        %v893 = vadd.f32 0.0, %v892
        %894 = vmatmul.f32.gmra.mxu0 %v873
        %v895 = vpop.f32.mrf.mxu0
        %v896 = vadd.f32 0.0, %v895
        %897 = vdwg.mxu0
        %898 = vmatpush.msra.mxu0 0.0
        %899 = vmatpush.msra.mxu0 0.0
        %900 = vmatpush.msra.mxu0 0.0
        %901 = vmatpush.msra.mxu0 0.0
        %902 = vmatpush.msra.mxu0 0.0
        %903 = vmatpush.msra.mxu0 0.0
        %904 = vmatpush.msra.mxu0 0.0
        %905 = vmatpush.msra.mxu0 0.0
        %906 = vmatpush.msra.mxu0 0.0
        %907 = vmatpush.msra.mxu0 0.0
        %908 = vmatpush.msra.mxu0 0.0
        %909 = vmatpush.msra.mxu0 0.0
        %910 = vmatpush.msra.mxu0 0.0
        %911 = vmatpush.msra.mxu0 0.0
        %912 = vmatpush.msra.mxu0 %v442
        %913 = vmatpush.msra.mxu0 %v440
        %914 = vmatmul.f32.gmra.mxu0 %v870
        %v915 = vpop.f32.mrf.mxu0
        %v916 = vadd.f32 0.0, %v915
        %917 = vmatmul.f32.gmra.mxu0 %v873
        %v918 = vpop.f32.mrf.mxu0
        %v919 = vadd.f32 0.0, %v918
        %920 = vdwg.mxu0
        %s921 = scalar_lea.vmem [#allocation8], 1024
        %v922 = vld [vmem:[%s921] sm:$0xff]
        %v923 = vld [vmem:[%s921 + $0x8] sm:$0xff]
        %v924 = vld [vmem:[%s921 + $0x10] sm:$0xff]
        %v925 = vld [vmem:[%s921 + $0x18] sm:$0xff]
        %v926 = vld [vmem:[%s921 + $0x20] sm:$0xff]
        %v927 = vld [vmem:[%s921 + $0x28] sm:$0xff]
        %v928 = vld [vmem:[%s921 + $0x30] sm:$0xff]
        %v929 = vld [vmem:[%s921 + $0x38] sm:$0xff]
        %v930 = vld [vmem:[%s921 + $0x40] sm:$0xff]
        %v931 = vld [vmem:[%s921 + $0x48] sm:$0xff]
        %v932 = vld [vmem:[%s921 + $0x50] sm:$0xff]
        %v933 = vld [vmem:[%s921 + $0x58] sm:$0xff]
        %v934 = vld [vmem:[%s921 + $0x60] sm:$0xff]
        %v935 = vld [vmem:[%s921 + $0x68] sm:$0xff]
        %v936 = vld [vmem:[%s921 + $0x70] sm:$0xff]
        %v937 = vld [vmem:[%s921 + $0x78] sm:$0xff]
        %v938 = vld [vmem:[%s921 + $0x80] sm:$0xff]
        %v939 = vld [vmem:[%s921 + $0x88] sm:$0xff]
        %v940 = vld [vmem:[%s921 + $0x90] sm:$0xff]
        %v941 = vld [vmem:[%s921 + $0x98] sm:$0xff]
        %v942 = vld [vmem:[%s921 + $0xa0] sm:$0xff]
        %v943 = vld [vmem:[%s921 + $0xa8] sm:$0xff]
        %v944 = vld [vmem:[%s921 + $0xb0] sm:$0xff]
        %v945 = vld [vmem:[%s921 + $0xb8] sm:$0xff]
        %v946 = vld [vmem:[%s921 + $0xc0] sm:$0xff]
        %v947 = vld [vmem:[%s921 + $0xc8] sm:$0xff]
        %v948 = vld [vmem:[%s921 + $0xd0] sm:$0xff]
        %v949 = vld [vmem:[%s921 + $0xd8] sm:$0xff]
        %v950 = vld [vmem:[%s921 + $0xe0] sm:$0xff]
        %v951 = vld [vmem:[%s921 + $0xe8] sm:$0xff]
        %v952 = vld [vmem:[%s921 + $0xf0] sm:$0xff]
        %v953 = vld [vmem:[%s921 + $0xf8] sm:$0xff]
        %v954 = vld [vmem:[%s921 + $0x100] sm:$0xff]
        %v955 = vld [vmem:[%s921 + $0x108] sm:$0xff]
        %v956 = vld [vmem:[%s921 + $0x110] sm:$0xff]
        %v957 = vld [vmem:[%s921 + $0x118] sm:$0xff]
        %v958 = vld [vmem:[%s921 + $0x120] sm:$0xff]
        %v959 = vld [vmem:[%s921 + $0x128] sm:$0xff]
        %v960 = vld [vmem:[%s921 + $0x130] sm:$0xff]
        %v961 = vld [vmem:[%s921 + $0x138] sm:$0xff]
        %v962 = vld [vmem:[%s921 + $0x140] sm:$0xff]
        %v963 = vld [vmem:[%s921 + $0x148] sm:$0xff]
        %v964 = vld [vmem:[%s921 + $0x150] sm:$0xff]
        %v965 = vld [vmem:[%s921 + $0x158] sm:$0xff]
        %v966 = vld [vmem:[%s921 + $0x160] sm:$0xff]
        %v967 = vld [vmem:[%s921 + $0x168] sm:$0xff]
        %v968 = vld [vmem:[%s921 + $0x170] sm:$0xff]
        %v969 = vld [vmem:[%s921 + $0x178] sm:$0xff]
        %v970 = vld [vmem:[%s921 + $0x180] sm:$0xff]
        %v971 = vld [vmem:[%s921 + $0x188] sm:$0xff]
        %v972 = vld [vmem:[%s921 + $0x190] sm:$0xff]
        %v973 = vld [vmem:[%s921 + $0x198] sm:$0xff]
        %v974 = vld [vmem:[%s921 + $0x1a0] sm:$0xff]
        %v975 = vld [vmem:[%s921 + $0x1a8] sm:$0xff]
        %v976 = vld [vmem:[%s921 + $0x1b0] sm:$0xff]
        %v977 = vld [vmem:[%s921 + $0x1b8] sm:$0xff]
        %v978 = vld [vmem:[%s921 + $0x1c0] sm:$0xff]
        %v979 = vld [vmem:[%s921 + $0x1c8] sm:$0xff]
        %v980 = vld [vmem:[%s921 + $0x1d0] sm:$0xff]
        %v981 = vld [vmem:[%s921 + $0x1d8] sm:$0xff]
        %v982 = vld [vmem:[%s921 + $0x1e0] sm:$0xff]
        %v983 = vld [vmem:[%s921 + $0x1e8] sm:$0xff]
        %v984 = vld [vmem:[%s921 + $0x1f0] sm:$0xff]
        %v985 = vld [vmem:[%s921 + $0x1f8] sm:$0xff]
        %986 = vmatpush.msra.mxu0 %v952
        %987 = vmatpush.msra.mxu0 %v950
        %988 = vmatpush.msra.mxu0 %v948
        %989 = vmatpush.msra.mxu0 %v946
        %990 = vmatpush.msra.mxu0 %v944
        %991 = vmatpush.msra.mxu0 %v942
        %992 = vmatpush.msra.mxu0 %v940
        %993 = vmatpush.msra.mxu0 %v938
        %994 = vmatpush.msra.mxu0 %v936
        %995 = vmatpush.msra.mxu0 %v934
        %996 = vmatpush.msra.mxu0 %v932
        %997 = vmatpush.msra.mxu0 %v930
        %998 = vmatpush.msra.mxu0 %v928
        %999 = vmatpush.msra.mxu0 %v926
        %1000 = vmatpush.msra.mxu0 %v924
        %1001 = vmatpush.msra.mxu0 %v922
        %1002 = vmatmul.f32.gmra.mxu0 %v893
        %v1003 = vpop.f32.mrf.mxu0
        %v1004 = vadd.f32 0.0, %v1003
        %1005 = vmatmul.f32.gmra.mxu0 %v896
        %v1006 = vpop.f32.mrf.mxu0
        %v1007 = vadd.f32 0.0, %v1006
        %1008 = vdwg.mxu0
        %1009 = vmatpush.msra.mxu0 %v984
        %1010 = vmatpush.msra.mxu0 %v982
        %1011 = vmatpush.msra.mxu0 %v980
        %1012 = vmatpush.msra.mxu0 %v978
        %1013 = vmatpush.msra.mxu0 %v976
        %1014 = vmatpush.msra.mxu0 %v974
        %1015 = vmatpush.msra.mxu0 %v972
        %1016 = vmatpush.msra.mxu0 %v970
        %1017 = vmatpush.msra.mxu0 %v968
        %1018 = vmatpush.msra.mxu0 %v966
        %1019 = vmatpush.msra.mxu0 %v964
        %1020 = vmatpush.msra.mxu0 %v962
        %1021 = vmatpush.msra.mxu0 %v960
        %1022 = vmatpush.msra.mxu0 %v958
        %1023 = vmatpush.msra.mxu0 %v956
        %1024 = vmatpush.msra.mxu0 %v954
        %1025 = vmatmul.f32.gmra.mxu0 %v916
        %v1026 = vpop.f32.mrf.mxu0
        %v1027 = vadd.f32 %v1004, %v1026
        %1028 = vmatmul.f32.gmra.mxu0 %v919
        %v1029 = vpop.f32.mrf.mxu0
        %v1030 = vadd.f32 %v1007, %v1029
        %1031 = vdwg.mxu0
        %1032 = vmatpush.msra.mxu0 %v953
        %1033 = vmatpush.msra.mxu0 %v951
        %1034 = vmatpush.msra.mxu0 %v949
        %1035 = vmatpush.msra.mxu0 %v947
        %1036 = vmatpush.msra.mxu0 %v945
        %1037 = vmatpush.msra.mxu0 %v943
        %1038 = vmatpush.msra.mxu0 %v941
        %1039 = vmatpush.msra.mxu0 %v939
        %1040 = vmatpush.msra.mxu0 %v937
        %1041 = vmatpush.msra.mxu0 %v935
        %1042 = vmatpush.msra.mxu0 %v933
        %1043 = vmatpush.msra.mxu0 %v931
        %1044 = vmatpush.msra.mxu0 %v929
        %1045 = vmatpush.msra.mxu0 %v927
        %1046 = vmatpush.msra.mxu0 %v925
        %1047 = vmatpush.msra.mxu0 %v923
        %1048 = vmatmul.f32.gmra.mxu0 %v893
        %v1049 = vpop.f32.mrf.mxu0
        %v1050 = vadd.f32 0.0, %v1049
        %1051 = vmatmul.f32.gmra.mxu0 %v896
        %v1052 = vpop.f32.mrf.mxu0
        %v1053 = vadd.f32 0.0, %v1052
        %1054 = vdwg.mxu0
        %1055 = vmatpush.msra.mxu0 %v985
        %1056 = vmatpush.msra.mxu0 %v983
        %1057 = vmatpush.msra.mxu0 %v981
        %1058 = vmatpush.msra.mxu0 %v979
        %1059 = vmatpush.msra.mxu0 %v977
        %1060 = vmatpush.msra.mxu0 %v975
        %1061 = vmatpush.msra.mxu0 %v973
        %1062 = vmatpush.msra.mxu0 %v971
        %1063 = vmatpush.msra.mxu0 %v969
        %1064 = vmatpush.msra.mxu0 %v967
        %1065 = vmatpush.msra.mxu0 %v965
        %1066 = vmatpush.msra.mxu0 %v963
        %1067 = vmatpush.msra.mxu0 %v961
        %1068 = vmatpush.msra.mxu0 %v959
        %1069 = vmatpush.msra.mxu0 %v957
        %1070 = vmatpush.msra.mxu0 %v955
        %1071 = vmatmul.f32.gmra.mxu0 %v916
        %v1072 = vpop.f32.mrf.mxu0
        %v1073 = vadd.f32 %v1050, %v1072
        %1074 = vmatmul.f32.gmra.mxu0 %v919
        %v1075 = vpop.f32.mrf.mxu0
        %v1076 = vadd.f32 %v1053, %v1075
        %1077 = vdwg.mxu0
        %v1078 = vadd.f32 %v815, %v1027
        %v1079 = vadd.f32 %v861, %v1073
        %v1080 = vadd.f32 %v818, %v1030
        %v1081 = vadd.f32 %v864, %v1076
        %s1082 = scalar_lea.vmem [#allocation11], 1
        %v1083 = vld [vmem:[%s1082] ss:$4 sm:$0x3]
        %v1085 = vperm.slane %v1083, 0
        %v1086 = vperm.slane %v1083, 1
        %v1089 = vadd.f32 %v1078, %v1085
        %v1090 = vadd.f32 %v1079, %v1086
        %v1091 = vadd.f32 %v1080, %v1085
        %v1092 = vadd.f32 %v1081, %v1086
        %v1093 = vmax.f32 %v1089, 0.0
        %v1094 = vmax.f32 %v1090, 0.0
        %v1095 = vmax.f32 %v1091, 0.0
        %v1096 = vmax.f32 %v1092, 0.0
        %v1097 = vld [vmem:[#allocation10] sm:$0xff]
        %v1098 = vld [vmem:[#allocation10 + $0x8] sm:$0xff]
        %v1099 = vld [vmem:[#allocation10 + $0x10] sm:$0xff]
        %v1100 = vld [vmem:[#allocation10 + $0x18] sm:$0xff]
        %v1101 = vld [vmem:[#allocation10 + $0x20] sm:$0xff]
        %v1102 = vld [vmem:[#allocation10 + $0x28] sm:$0xff]
        %v1103 = vld [vmem:[#allocation10 + $0x30] sm:$0xff]
        %v1104 = vld [vmem:[#allocation10 + $0x38] sm:$0xff]
        %v1105 = vld [vmem:[#allocation10 + $0x40] sm:$0xff]
        %v1106 = vld [vmem:[#allocation10 + $0x48] sm:$0xff]
        %v1107 = vld [vmem:[#allocation10 + $0x50] sm:$0xff]
        %v1108 = vld [vmem:[#allocation10 + $0x58] sm:$0xff]
        %v1109 = vld [vmem:[#allocation10 + $0x60] sm:$0xff]
        %v1110 = vld [vmem:[#allocation10 + $0x68] sm:$0xff]
        %v1111 = vld [vmem:[#allocation10 + $0x70] sm:$0xff]
        %v1112 = vld [vmem:[#allocation10 + $0x78] sm:$0xff]
        %v1113 = vld [vmem:[#allocation10 + $0x80] sm:$0xff]
        %v1114 = vld [vmem:[#allocation10 + $0x88] sm:$0xff]
        %v1115 = vld [vmem:[#allocation10 + $0x90] sm:$0xff]
        %v1116 = vld [vmem:[#allocation10 + $0x98] sm:$0xff]
        %v1117 = vld [vmem:[#allocation10 + $0xa0] sm:$0xff]
        %v1118 = vld [vmem:[#allocation10 + $0xa8] sm:$0xff]
        %v1119 = vld [vmem:[#allocation10 + $0xb0] sm:$0xff]
        %v1120 = vld [vmem:[#allocation10 + $0xb8] sm:$0xff]
        %v1121 = vld [vmem:[#allocation10 + $0xc0] sm:$0xff]
        %v1122 = vld [vmem:[#allocation10 + $0xc8] sm:$0xff]
        %v1123 = vld [vmem:[#allocation10 + $0xd0] sm:$0xff]
        %v1124 = vld [vmem:[#allocation10 + $0xd8] sm:$0xff]
        %v1125 = vld [vmem:[#allocation10 + $0xe0] sm:$0xff]
        %v1126 = vld [vmem:[#allocation10 + $0xe8] sm:$0xff]
        %v1127 = vld [vmem:[#allocation10 + $0xf0] sm:$0xff]
        %v1128 = vld [vmem:[#allocation10 + $0xf8] sm:$0xff]
        %v1129 = vld [vmem:[#allocation11 + $0x2] sm:$0x1]
        %v1130 = vperm.slane %v1129, 0
        %1131 = vmatpush.msra.mxu0 %v1112
        %1132 = vmatpush.msra.mxu0 %v1111
        %1133 = vmatpush.msra.mxu0 %v1110
        %1134 = vmatpush.msra.mxu0 %v1109
        %1135 = vmatpush.msra.mxu0 %v1108
        %1136 = vmatpush.msra.mxu0 %v1107
        %1137 = vmatpush.msra.mxu0 %v1106
        %1138 = vmatpush.msra.mxu0 %v1105
        %1139 = vmatpush.msra.mxu0 %v1104
        %1140 = vmatpush.msra.mxu0 %v1103
        %1141 = vmatpush.msra.mxu0 %v1102
        %1142 = vmatpush.msra.mxu0 %v1101
        %1143 = vmatpush.msra.mxu0 %v1100
        %1144 = vmatpush.msra.mxu0 %v1099
        %1145 = vmatpush.msra.mxu0 %v1098
        %1146 = vmatpush.msra.mxu0 %v1097
        %1147 = vmatmul.f32.gmra.mxu0 %v1093
        %v1148 = vpop.f32.mrf.mxu0
        %v1149 = vadd.f32 %v1130, %v1148
        %1150 = vmatmul.f32.gmra.mxu0 %v1095
        %v1151 = vpop.f32.mrf.mxu0
        %v1152 = vadd.f32 %v1130, %v1151
        %1153 = vdwg.mxu0
        %1154 = vmatpush.msra.mxu0 %v1128
        %1155 = vmatpush.msra.mxu0 %v1127
        %1156 = vmatpush.msra.mxu0 %v1126
        %1157 = vmatpush.msra.mxu0 %v1125
        %1158 = vmatpush.msra.mxu0 %v1124
        %1159 = vmatpush.msra.mxu0 %v1123
        %1160 = vmatpush.msra.mxu0 %v1122
        %1161 = vmatpush.msra.mxu0 %v1121
        %1162 = vmatpush.msra.mxu0 %v1120
        %1163 = vmatpush.msra.mxu0 %v1119
        %1164 = vmatpush.msra.mxu0 %v1118
        %1165 = vmatpush.msra.mxu0 %v1117
        %1166 = vmatpush.msra.mxu0 %v1116
        %1167 = vmatpush.msra.mxu0 %v1115
        %1168 = vmatpush.msra.mxu0 %v1114
        %1169 = vmatpush.msra.mxu0 %v1113
        %1170 = vmatmul.f32.gmra.mxu0 %v1094
        %v1171 = vpop.f32.mrf.mxu0
        %v1172 = vadd.f32 %v1149, %v1171
        %1173 = vmatmul.f32.gmra.mxu0 %v1096
        %v1174 = vpop.f32.mrf.mxu0
        %v1175 = vadd.f32 %v1152, %v1174
        %1176 = vdwg.mxu0
        %v1177 = vadd.f32 %v1172, %v353
        %v1178 = vadd.f32 %v1175, %v354
        %v1179 = vmax.f32 %v1177, 0.0
        %v1180 = vmax.f32 %v1178, 0.0
        %1181 = vst [vmem:[%s352] sm:$0xff] %v1179
        %1182 = vst [vmem:[%s352 + $0x8] sm:$0xff] %v1180
        %s1183 = sand.u32 %s165, 1
        %s1184 = scalar_lea.sflag [#allocation4], %s1183
        %s1185 = sand.u32 %s165, 1
        %s1186 = smul.addr %s1185, 16
        %s1187 = scalar_lea.vmem [#allocation13], %s1186
        // Predicated region
        $region69: #{tpu_custom_call.1} parent=43 // pred_check
          %p1188 = pneg %p175
        $region70: #{tpu_custom_call.1} parent=43 // pred_check_branch
          %1190 = sbr.rel (%p1188) target = $region72
        $region71: #{tpu_custom_call.1} parent=43 // pred_region
          %1192 = vsyncadd %s1184, 0
          %s1193 = smul.addr %s26, 2
          %s1194 = smul.addr %s1193, 8
          %s1195 = scalar_lea.hbm %s6, %s1194
          %s1196 = sshll.u32 %s1187, 4
          %s1197 = int_to_ptr.vmem [resolvable:$true] %s1196
          %s1198 = sshll.u32 %s1195, 4
          %s1199 = int_to_ptr.hbm [resolvable:$true] %s1198
          %1204 = dma.vmem_to_hbm [thread:$0]  %s1197, 256, %s1199, %s1184, 128, 128, 8
        $region72: #{tpu_custom_call.1} parent=43 // pred_fallthru
          _
      $region44: #{tpu_custom_call.1} parent=5 // pred_fallthru
        _
      %p1205 = scmp.le.s32.totalorder 2, %s21
      // Predicated region
      $region73: #{tpu_custom_call.1} parent=5 // pred_check
        %p1206 = pneg %p1205
      $region74: #{tpu_custom_call.1} parent=5 // pred_check_branch
        %1208 = sbr.rel (%p1206) target = $region76
      $region75: #{tpu_custom_call.1} parent=5 // pred_region
        %s1209 = ssub.s32 %s21, 2
        // Predicated region
        $region77: #{tpu_custom_call.1} parent=75 // pred_check
          %p1210 = pneg %p181
        $region78: #{tpu_custom_call.1} parent=75 // pred_check_branch
          %1212 = sbr.rel (%p1210) target = $region80
        $region79: #{tpu_custom_call.1} parent=75 // pred_region
          %s1213 = sand.u32 %s166, 1
          %s1214 = scalar_lea.sflag [#allocation4], %s1213
          %s1215 = sand.u32 %s166, 1
          %s1216 = smul.addr %s1215, 16
          %s1217 = scalar_lea.vmem [#allocation13], %s1216
          %1219 = dma.done %s1214, 256
        $region80: #{tpu_custom_call.1} parent=75 // pred_fallthru
          _
      $region76: #{tpu_custom_call.1} parent=5 // pred_fallthru
        _
    $region6: #{tpu_custom_call.1} parent=1 // loop_footer
      %s25 = sadd.s32 1, %s21
    $region7: #{tpu_custom_call.1} parent=1 // loop_footer_branch
      %20 = sbr.rel target = $region3
    $region8: #{tpu_custom_call.1} parent=1 // loop_exit
      _
    %1220 = vsyncpa [#allocation3], 1
    %s1221 = scalar_lea.sflag [#allocation3], 1
    %1222 = vsyncpa %s1221, 1
    %1223 = vsyncpa [#allocation6], 1
    %1224 = vsyncpa [#allocation9], 1
    %1225 = vsyncpa [#allocation12], 1
    %1226 = vsyncpa [#allocation4], 1
    %s1227 = scalar_lea.sflag [#allocation4], 1
    %1228 = vsyncpa %s1227, 1

</llo_original>
